<compile_context>
chip_gen: v7x
topology: tpu7x:2x2x1
jax: 0.10.0
libtpu: 0.0.40
codegen_flags: <defaults>
</compile_context>

<pallas_src>
import jax
import jax.numpy as jnp
from jax import lax
from jax.experimental import pallas as pl
from jax.experimental.pallas import tpu as pltpu

_EPS = 1e-5  # nn.InstanceNorm2d default eps (affine=False, no running stats)


def _one_pass_instance_norm(h, num_images, hw):
    """InstanceNorm2d(affine=False), per image, single sweep (biased var)."""
    c = h.shape[-1]
    h3 = h.reshape(num_images, hw, c)
    s = jnp.sum(h3, axis=1, keepdims=True)
    ss = jnp.sum(h3 * h3, axis=1, keepdims=True)
    inv = 1.0 / hw
    mean = s * inv
    var = jnp.maximum(ss * inv - mean * mean, 0.0)
    out = (h3 - mean) * lax.rsqrt(var + _EPS)
    return out.reshape(num_images * hw, c)


def _im2col_3x3_into(x, patch_ref):
    """Write 3x3 'SAME' im2col patches of x into patch_ref.

    x: (B, H, W, C) f32;  patch_ref: VMEM (B*H*W, 9*C) f32.
    Columns are tap-major / channel-minor (t = kh*3 + kw), matching the
    flattened weight layout produced by the wrapper.
    """
    B, H, W, C = x.shape
    xp = jnp.pad(x, ((0, 0), (1, 1), (1, 1), (0, 0)))
    for dy in range(3):
        for dx in range(3):
            t = dy * 3 + dx
            tap = xp[:, dy:dy + H, dx:dx + W, :].reshape(B * H * W, C)
            patch_ref[:, t * C:(t + 1) * C] = tap


def _downsample_conv_kernel(x_ref, w1_ref, w2_ref, wid_ref, bid_ref, o_ref,
                            p1_ref, p2_ref):
    # x_ref : (B, H, 2, W, 2*Cin) f32   (free view of the NHWC image)
    # w1_ref: (9*Cin, Cout) bf16        w2_ref : (9*Cout, Cout) bf16
    # wid_ref: (Cin, Cout) bf16         bid_ref: (1, Cout) f32
    # o_ref : (B, H*W, Cout) f32
    # p1_ref: (B*H*W, 9*Cin) f32 scratch;  p2_ref: (B*H*W, 9*Cout) f32 scratch
    B, H, _, W, two_cin = x_ref.shape
    Cin = two_cin // 2
    Cout = o_ref.shape[-1]
    HW = H * W

    # --- MaxPool2d(2): H-pairs on the size-2 leading axis, W-pairs as the two
    # Cin-wide halves of the lane axis (both exposed by the free wrapper view).
    x = x_ref[...]                                        # (B, H, 2, W, 2Cin)
    xh = jnp.maximum(x[:, :, 0], x[:, :, 1])              # (B, H, W, 2Cin)
    pooled = jnp.maximum(xh[..., :Cin], xh[..., Cin:])    # (B, H, W, Cin) f32

    # --- ResBlock main branch: conv3x3 -> IN -> ReLU -> conv3x3 -> IN -> ReLU
    # Each conv is a single im2col dot (K = 9*C) on the MXU: bf16 in, f32 acc.
    _im2col_3x3_into(pooled, p1_ref)
    h = jnp.dot(p1_ref[...].astype(jnp.bfloat16), w1_ref[...],
                preferred_element_type=jnp.float32)       # (B*HW, Cout)
    h = jnp.maximum(_one_pass_instance_norm(h, B, HW), 0.0)

    _im2col_3x3_into(h.reshape(B, H, W, Cout), p2_ref)
    h = jnp.dot(p2_ref[...].astype(jnp.bfloat16), w2_ref[...],
                preferred_element_type=jnp.float32)       # (B*HW, Cout)
    h = jnp.maximum(_one_pass_instance_norm(h, B, HW), 0.0)

    # --- identity branch: 1x1 conv with bias (bias added in f32)
    res = jnp.dot(pooled.reshape(B * HW, Cin).astype(jnp.bfloat16),
                  wid_ref[...],
                  preferred_element_type=jnp.float32) + bid_ref[...]

    out = jnp.maximum(h + res, 0.0)                       # final ReLU of the skip
    o_ref[...] = out.reshape(B, HW, Cout).astype(o_ref.dtype)


def _pick_batch_block(n, h, w, cin, cout):
    """Images per grid step: amortize per-step overhead for small problems while
    keeping >= 2 grid steps so both v7x TensorCores stay busy."""
    if n <= 2:
        return 1
    # rough f32 bytes of per-image live values inside one grid step
    per_img = 4 * h * w * (4 * cin + 10 * cin + 12 * cout + 8)
    budget = 8 * 1024 * 1024
    bb = int(max(1, min(n // 2, budget // max(per_img, 1))))
    while n % bb:
        bb -= 1
    return bb


def downsample_conv(x_nchw, params, batch_block=None):
    """Pallas forward.  x_nchw: (N, Cin, 2H, 2W) f32 -> (N, Cout, H, W) f32.

    params are PyTorch-shaped: w1 (Cout,Cin,3,3), w2 (Cout,Cout,3,3),
    wid (Cout,Cin,1,1), bid (Cout,).
    """
    w1, w2, wid, bid = params
    N, Cin, H2, W2 = x_nchw.shape
    assert H2 % 2 == 0 and W2 % 2 == 0
    H, W = H2 // 2, W2 // 2
    Cout = w1.shape[0]

    bb = _pick_batch_block(N, H, W, Cin, Cout) if batch_block is None else batch_block
    assert N % bb == 0

    # One NCHW->NHWC layout pass (channels on lanes), then a FREE reshape that
    # exposes the 2x2 pool window (no extra HBM pass).
    x = jnp.transpose(x_nchw, (0, 2, 3, 1)).reshape(N, H, 2, W, 2 * Cin)

    # Flatten conv weights tap-major/channel-minor for the im2col dots and cast
    # to bf16 for the MXU (accumulation stays f32 inside the kernel).
    w1f = jnp.transpose(w1, (2, 3, 1, 0)).reshape(9 * Cin, Cout).astype(jnp.bfloat16)
    w2f = jnp.transpose(w2, (2, 3, 1, 0)).reshape(9 * Cout, Cout).astype(jnp.bfloat16)
    widf = jnp.transpose(wid.reshape(Cout, Cin), (1, 0)).astype(jnp.bfloat16)
    bidf = bid.reshape(1, Cout).astype(jnp.float32)

    out = pl.pallas_call(
        _downsample_conv_kernel,
        out_shape=jax.ShapeDtypeStruct((N, H * W, Cout), jnp.float32),
        grid_spec=pltpu.PrefetchScalarGridSpec(
            num_scalar_prefetch=0,
            grid=(N // bb,),
            in_specs=[
                pl.BlockSpec((bb, H, 2, W, 2 * Cin), lambda n: (n, 0, 0, 0, 0)),
                pl.BlockSpec((9 * Cin, Cout), lambda n: (0, 0)),
                pl.BlockSpec((9 * Cout, Cout), lambda n: (0, 0)),
                pl.BlockSpec((Cin, Cout), lambda n: (0, 0)),
                pl.BlockSpec((1, Cout), lambda n: (0, 0)),
            ],
            out_specs=pl.BlockSpec((bb, H * W, Cout), lambda n: (n, 0, 0)),
            scratch_shapes=[
                pltpu.VMEM((bb * H * W, 9 * Cin), jnp.float32),
                pltpu.VMEM((bb * H * W, 9 * Cout), jnp.float32),
            ],
        ),
        compiler_params=pltpu.CompilerParams(
            dimension_semantics=("parallel",),
            vmem_limit_bytes=64 * 1024 * 1024,
        ),
    )(x, w1f, w2f, widf, bidf)

    # Free reshape + the single NHWC->NCHW layout pass back to the PyTorch layout.
    return jnp.transpose(out.reshape(N, H, W, Cout), (0, 3, 1, 2))


def init_params(key, in_channels, out_channels):
    """Deterministic synthetic parameters in PyTorch layouts."""
    k1, k2, k3, k4 = jax.random.split(key, 4)
    w1 = 0.1 * jax.random.normal(k1, (out_channels, in_channels, 3, 3), jnp.float32)
    w2 = 0.1 * jax.random.normal(k2, (out_channels, out_channels, 3, 3), jnp.float32)
    wid = 0.1 * jax.random.normal(k3, (out_channels, in_channels, 1, 1), jnp.float32)
    bid = 0.1 * jax.random.normal(k4, (out_channels,), jnp.float32)
    return w1, w2, wid, bid


def downsample_conv_ref(x_nchw, params):
    """Pure-JAX f32 reference with the PyTorch module's semantics."""
    w1, w2, wid, bid = params
    Cout = w1.shape[0]
    x = jnp.transpose(x_nchw, (0, 2, 3, 1))                     # NHWC
    N, H2, W2, Cin = x.shape
    xp = x.reshape(N, H2 // 2, 2, W2 // 2, 2, Cin).max(axis=(2, 4))

    def conv(h, w):  # w: (O, I, 3, 3)
        return lax.conv_general_dilated(
            h, jnp.transpose(w, (2, 3, 1, 0)), window_strides=(1, 1),
            padding="SAME", dimension_numbers=("NHWC", "HWIO", "NHWC"))

    def inorm(h):
        m = h.mean(axis=(1, 2), keepdims=True)
        v = ((h - m) ** 2).mean(axis=(1, 2), keepdims=True)
        return (h - m) / jnp.sqrt(v + _EPS)

    h = jax.nn.relu(inorm(conv(xp, w1)))
    h = jax.nn.relu(inorm(conv(h, w2)))
    res = jnp.einsum("nhwc,oc->nhwo", xp, wid.reshape(Cout, Cin)) \
        + bid.reshape(1, 1, 1, Cout)
    out = jax.nn.relu(h + res)
    return jnp.transpose(out, (0, 3, 1, 2))


if __name__ == "__main__":
    key = jax.random.PRNGKey(0)
    kx, kp = jax.random.split(key)

    N, Cin, Cout, S = 2, 4, 8, 16                    # x: (2, 4, 16, 16) NCHW
    x = jax.random.normal(kx, (N, Cin, S, S), jnp.float32)
    params = init_params(kp, Cin, Cout)

    out = jax.block_until_ready(downsample_conv(x, params))
    ref = jax.block_until_ready(downsample_conv_ref(x, params))

    assert out.shape == (N, Cout, S // 2, S // 2), out.shape
    # bf16 MXU inputs (f32 accumulation) -> compare against the f32 reference
    # with a correspondingly looser tolerance.
    max_err = float(jnp.max(jnp.abs(out - ref)))
    assert jnp.allclose(out, ref, rtol=5e-2, atol=5e-2), max_err
    print("KERNEL_OK")
</pallas_src>

<mosaic_0001>
module attributes {stable_mosaic.version = 11 : i64} {
  func.func @_downsample_conv_kernel(%arg0: i32, %arg1: memref<1x8x2x8x8xf32, #tpu.memory_space<vmem>>, %arg2: memref<36x8xbf16, #tpu.memory_space<vmem>>, %arg3: memref<72x8xbf16, #tpu.memory_space<vmem>>, %arg4: memref<4x8xbf16, #tpu.memory_space<vmem>>, %arg5: memref<1x8xf32, #tpu.memory_space<vmem>>, %arg6: memref<1x64x8xf32, #tpu.memory_space<vmem>>, %arg7: memref<64x36xf32, #tpu.memory_space<vmem>>, %arg8: memref<64x72xf32, #tpu.memory_space<vmem>>) attributes {dimension_semantics = [#tpu.dimension_semantics<parallel>], iteration_bounds = array<i64: 2>, scalar_prefetch = 0 : i64, scratch_operands = 2 : i64, tpu.core_type = #tpu.core_type<tc>, window_params = [{transform_indices = @transform_0, window_bounds = array<i64: 1, 8, 2, 8, 8>}, {pipeline_mode = #tpu.pipeline_mode<synchronous>, transform_indices = @transform_1, window_bounds = array<i64: 36, 8>}, {pipeline_mode = #tpu.pipeline_mode<synchronous>, transform_indices = @transform_2, window_bounds = array<i64: 72, 8>}, {pipeline_mode = #tpu.pipeline_mode<synchronous>, transform_indices = @transform_3, window_bounds = array<i64: 4, 8>}, {pipeline_mode = #tpu.pipeline_mode<synchronous>, transform_indices = @transform_4, window_bounds = array<i64: 1, 8>}, {transform_indices = @transform_5, window_bounds = array<i64: 1, 64, 8>}]} {
    %c0 = arith.constant 0 : index
    %c0_0 = arith.constant 0 : index
    %c0_1 = arith.constant 0 : index
    %c0_2 = arith.constant 0 : index
    %c0_3 = arith.constant 0 : index
    %0 = vector.load %arg1[%c0, %c0_0, %c0_1, %c0_2, %c0_3] : memref<1x8x2x8x8xf32, #tpu.memory_space<vmem>>, vector<1x8x2x8x8xf32>
    %1 = vector.extract_strided_slice %0 {offsets = [0, 0, 0, 0, 0], sizes = [1, 8, 1, 8, 8], strides = [1, 1, 1, 1, 1]} : vector<1x8x2x8x8xf32> to vector<1x8x1x8x8xf32>
    %2 = vector.shape_cast %1 : vector<1x8x1x8x8xf32> to vector<1x8x8x8xf32>
    %3 = vector.extract_strided_slice %0 {offsets = [0, 0, 1, 0, 0], sizes = [1, 8, 1, 8, 8], strides = [1, 1, 1, 1, 1]} : vector<1x8x2x8x8xf32> to vector<1x8x1x8x8xf32>
    %4 = vector.shape_cast %3 : vector<1x8x1x8x8xf32> to vector<1x8x8x8xf32>
    %5 = arith.maximumf %2, %4 : vector<1x8x8x8xf32>
    %6 = vector.extract_strided_slice %5 {offsets = [0, 0, 0, 0], sizes = [1, 8, 8, 4], strides = [1, 1, 1, 1]} : vector<1x8x8x8xf32> to vector<1x8x8x4xf32>
    %7 = vector.extract_strided_slice %5 {offsets = [0, 0, 0, 4], sizes = [1, 8, 8, 4], strides = [1, 1, 1, 1]} : vector<1x8x8x8xf32> to vector<1x8x8x4xf32>
    %8 = arith.maximumf %6, %7 : vector<1x8x8x4xf32>
    %c0_i32 = arith.constant 0 : i32
    %9 = arith.sitofp %c0_i32 : i32 to f32
    %10 = vector.broadcast %9 : f32 to vector<1x1x8x4xf32>
    %11 = tpu.concatenate %10, %8 in 1 : vector<1x1x8x4xf32>, vector<1x8x8x4xf32> -> vector<1x9x8x4xf32>
    %12 = vector.broadcast %9 : f32 to vector<1x1x8x4xf32>
    %13 = tpu.concatenate %11, %12 in 1 : vector<1x9x8x4xf32>, vector<1x1x8x4xf32> -> vector<1x10x8x4xf32>
    %14 = vector.broadcast %9 : f32 to vector<1x10x1x4xf32>
    %15 = tpu.concatenate %14, %13 in 2 : vector<1x10x1x4xf32>, vector<1x10x8x4xf32> -> vector<1x10x9x4xf32>
    %16 = vector.broadcast %9 : f32 to vector<1x10x1x4xf32>
    %17 = tpu.concatenate %15, %16 in 2 : vector<1x10x9x4xf32>, vector<1x10x1x4xf32> -> vector<1x10x10x4xf32>
    %18 = vector.extract_strided_slice %17 {offsets = [0, 0, 0, 0], sizes = [1, 8, 8, 4], strides = [1, 1, 1, 1]} : vector<1x10x10x4xf32> to vector<1x8x8x4xf32>
    %19 = vector.shape_cast %18 : vector<1x8x8x4xf32> to vector<64x4xf32>
    %c0_4 = arith.constant 0 : index
    %c0_5 = arith.constant 0 : index
    %20 = vector.load %arg7[%c0_4, %c0_5] : memref<64x36xf32, #tpu.memory_space<vmem>>, vector<64x4xf32>
    tpu.vector_store %arg7[%c0_4, %c0_5], %19 {strides = array<i32>} : memref<64x36xf32, #tpu.memory_space<vmem>>, vector<64x4xf32>,
    %21 = vector.extract_strided_slice %17 {offsets = [0, 0, 1, 0], sizes = [1, 8, 8, 4], strides = [1, 1, 1, 1]} : vector<1x10x10x4xf32> to vector<1x8x8x4xf32>
    %22 = vector.shape_cast %21 : vector<1x8x8x4xf32> to vector<64x4xf32>
    %c0_6 = arith.constant 0 : index
    %c4 = arith.constant 4 : index
    %23 = vector.load %arg7[%c0_6, %c4] : memref<64x36xf32, #tpu.memory_space<vmem>>, vector<64x4xf32>
    tpu.vector_store %arg7[%c0_6, %c4], %22 {strides = array<i32>} : memref<64x36xf32, #tpu.memory_space<vmem>>, vector<64x4xf32>,
    %24 = vector.extract_strided_slice %17 {offsets = [0, 0, 2, 0], sizes = [1, 8, 8, 4], strides = [1, 1, 1, 1]} : vector<1x10x10x4xf32> to vector<1x8x8x4xf32>
    %25 = vector.shape_cast %24 : vector<1x8x8x4xf32> to vector<64x4xf32>
    %c0_7 = arith.constant 0 : index
    %c8 = arith.constant 8 : index
    %26 = vector.load %arg7[%c0_7, %c8] : memref<64x36xf32, #tpu.memory_space<vmem>>, vector<64x4xf32>
    tpu.vector_store %arg7[%c0_7, %c8], %25 {strides = array<i32>} : memref<64x36xf32, #tpu.memory_space<vmem>>, vector<64x4xf32>,
    %27 = vector.extract_strided_slice %17 {offsets = [0, 1, 0, 0], sizes = [1, 8, 8, 4], strides = [1, 1, 1, 1]} : vector<1x10x10x4xf32> to vector<1x8x8x4xf32>
    %28 = vector.shape_cast %27 : vector<1x8x8x4xf32> to vector<64x4xf32>
    %c0_8 = arith.constant 0 : index
    %c12 = arith.constant 12 : index
    %29 = vector.load %arg7[%c0_8, %c12] : memref<64x36xf32, #tpu.memory_space<vmem>>, vector<64x4xf32>
    tpu.vector_store %arg7[%c0_8, %c12], %28 {strides = array<i32>} : memref<64x36xf32, #tpu.memory_space<vmem>>, vector<64x4xf32>,
    %30 = vector.extract_strided_slice %17 {offsets = [0, 1, 1, 0], sizes = [1, 8, 8, 4], strides = [1, 1, 1, 1]} : vector<1x10x10x4xf32> to vector<1x8x8x4xf32>
    %31 = vector.shape_cast %30 : vector<1x8x8x4xf32> to vector<64x4xf32>
    %c0_9 = arith.constant 0 : index
    %c16 = arith.constant 16 : index
    %32 = vector.load %arg7[%c0_9, %c16] : memref<64x36xf32, #tpu.memory_space<vmem>>, vector<64x4xf32>
    tpu.vector_store %arg7[%c0_9, %c16], %31 {strides = array<i32>} : memref<64x36xf32, #tpu.memory_space<vmem>>, vector<64x4xf32>,
    %33 = vector.extract_strided_slice %17 {offsets = [0, 1, 2, 0], sizes = [1, 8, 8, 4], strides = [1, 1, 1, 1]} : vector<1x10x10x4xf32> to vector<1x8x8x4xf32>
    %34 = vector.shape_cast %33 : vector<1x8x8x4xf32> to vector<64x4xf32>
    %c0_10 = arith.constant 0 : index
    %c20 = arith.constant 20 : index
    %35 = vector.load %arg7[%c0_10, %c20] : memref<64x36xf32, #tpu.memory_space<vmem>>, vector<64x4xf32>
    tpu.vector_store %arg7[%c0_10, %c20], %34 {strides = array<i32>} : memref<64x36xf32, #tpu.memory_space<vmem>>, vector<64x4xf32>,
    %36 = vector.extract_strided_slice %17 {offsets = [0, 2, 0, 0], sizes = [1, 8, 8, 4], strides = [1, 1, 1, 1]} : vector<1x10x10x4xf32> to vector<1x8x8x4xf32>
    %37 = vector.shape_cast %36 : vector<1x8x8x4xf32> to vector<64x4xf32>
    %c0_11 = arith.constant 0 : index
    %c24 = arith.constant 24 : index
    %38 = vector.load %arg7[%c0_11, %c24] : memref<64x36xf32, #tpu.memory_space<vmem>>, vector<64x4xf32>
    tpu.vector_store %arg7[%c0_11, %c24], %37 {strides = array<i32>} : memref<64x36xf32, #tpu.memory_space<vmem>>, vector<64x4xf32>,
    %39 = vector.extract_strided_slice %17 {offsets = [0, 2, 1, 0], sizes = [1, 8, 8, 4], strides = [1, 1, 1, 1]} : vector<1x10x10x4xf32> to vector<1x8x8x4xf32>
    %40 = vector.shape_cast %39 : vector<1x8x8x4xf32> to vector<64x4xf32>
    %c0_12 = arith.constant 0 : index
    %c28 = arith.constant 28 : index
    %41 = vector.load %arg7[%c0_12, %c28] : memref<64x36xf32, #tpu.memory_space<vmem>>, vector<64x4xf32>
    tpu.vector_store %arg7[%c0_12, %c28], %40 {strides = array<i32>} : memref<64x36xf32, #tpu.memory_space<vmem>>, vector<64x4xf32>,
    %42 = vector.extract_strided_slice %17 {offsets = [0, 2, 2, 0], sizes = [1, 8, 8, 4], strides = [1, 1, 1, 1]} : vector<1x10x10x4xf32> to vector<1x8x8x4xf32>
    %43 = vector.shape_cast %42 : vector<1x8x8x4xf32> to vector<64x4xf32>
    %c0_13 = arith.constant 0 : index
    %c32 = arith.constant 32 : index
    %44 = vector.load %arg7[%c0_13, %c32] : memref<64x36xf32, #tpu.memory_space<vmem>>, vector<64x4xf32>
    tpu.vector_store %arg7[%c0_13, %c32], %43 {strides = array<i32>} : memref<64x36xf32, #tpu.memory_space<vmem>>, vector<64x4xf32>,
    %c0_14 = arith.constant 0 : index
    %c0_15 = arith.constant 0 : index
    %45 = vector.load %arg7[%c0_14, %c0_15] : memref<64x36xf32, #tpu.memory_space<vmem>>, vector<64x36xf32>
    %46 = arith.truncf %45 : vector<64x36xf32> to vector<64x36xbf16>
    %c0_16 = arith.constant 0 : index
    %c0_17 = arith.constant 0 : index
    %47 = vector.load %arg2[%c0_16, %c0_17] : memref<36x8xbf16, #tpu.memory_space<vmem>>, vector<36x8xbf16>
    %cst = arith.constant dense<0.000000e+00> : vector<64x8xf32>
    %48 = tpu.matmul %46, %47, %cst {dimension_numbers = #tpu.dot_dimension_numbers<[1], [0], [0], [1], [0, 0, 1, 1], [], []>} : vector<64x36xbf16>, vector<36x8xbf16>, vector<64x8xf32> -> vector<64x8xf32>
    %49 = vector.shape_cast %48 : vector<64x8xf32> to vector<1x64x8xf32>
    %cst_18 = arith.constant dense<0.000000e+00> : vector<1x8xf32>
    %50 = vector.multi_reduction <add>, %49, %cst_18 [1] : vector<1x64x8xf32> to vector<1x8xf32>
    %51 = vector.shape_cast %50 : vector<1x8xf32> to vector<1x1x8xf32>
    %52 = arith.mulf %49, %49 : vector<1x64x8xf32>
    %cst_19 = arith.constant dense<0.000000e+00> : vector<1x8xf32>
    %53 = vector.multi_reduction <add>, %52, %cst_19 [1] : vector<1x64x8xf32> to vector<1x8xf32>
    %54 = vector.shape_cast %53 : vector<1x8xf32> to vector<1x1x8xf32>
    %cst_20 = arith.constant 1.562500e-02 : f32
    %55 = vector.broadcast %cst_20 : f32 to vector<1x1x8xf32>
    %56 = arith.mulf %51, %55 : vector<1x1x8xf32>
    %cst_21 = arith.constant 1.562500e-02 : f32
    %57 = vector.broadcast %cst_21 : f32 to vector<1x1x8xf32>
    %58 = arith.mulf %54, %57 : vector<1x1x8xf32>
    %59 = arith.mulf %56, %56 : vector<1x1x8xf32>
    %60 = arith.subf %58, %59 : vector<1x1x8xf32>
    %cst_22 = arith.constant 0.000000e+00 : f32
    %61 = vector.broadcast %cst_22 : f32 to vector<1x1x8xf32>
    %62 = arith.maximumf %60, %61 : vector<1x1x8xf32>
    %63 = vector.broadcast %56 : vector<1x1x8xf32> to vector<1x64x8xf32>
    %64 = arith.subf %49, %63 : vector<1x64x8xf32>
    %cst_23 = arith.constant 9.99999974E-6 : f32
    %65 = vector.broadcast %cst_23 : f32 to vector<1x1x8xf32>
    %66 = arith.addf %62, %65 : vector<1x1x8xf32>
    %67 = math.rsqrt %66 : vector<1x1x8xf32>
    %68 = vector.broadcast %67 : vector<1x1x8xf32> to vector<1x64x8xf32>
    %69 = arith.mulf %64, %68 : vector<1x64x8xf32>
    %70 = vector.shape_cast %69 : vector<1x64x8xf32> to vector<64x8xf32>
    %cst_24 = arith.constant 0.000000e+00 : f32
    %71 = vector.broadcast %cst_24 : f32 to vector<64x8xf32>
    %72 = arith.maximumf %70, %71 : vector<64x8xf32>
    %73 = vector.shape_cast %72 : vector<64x8xf32> to vector<1x8x8x8xf32>
    %c0_i32_25 = arith.constant 0 : i32
    %74 = arith.sitofp %c0_i32_25 : i32 to f32
    %75 = vector.broadcast %74 : f32 to vector<1x1x8x8xf32>
    %76 = tpu.concatenate %75, %73 in 1 : vector<1x1x8x8xf32>, vector<1x8x8x8xf32> -> vector<1x9x8x8xf32>
    %77 = vector.broadcast %74 : f32 to vector<1x1x8x8xf32>
    %78 = tpu.concatenate %76, %77 in 1 : vector<1x9x8x8xf32>, vector<1x1x8x8xf32> -> vector<1x10x8x8xf32>
    %79 = vector.broadcast %74 : f32 to vector<1x10x1x8xf32>
    %80 = tpu.concatenate %79, %78 in 2 : vector<1x10x1x8xf32>, vector<1x10x8x8xf32> -> vector<1x10x9x8xf32>
    %81 = vector.broadcast %74 : f32 to vector<1x10x1x8xf32>
    %82 = tpu.concatenate %80, %81 in 2 : vector<1x10x9x8xf32>, vector<1x10x1x8xf32> -> vector<1x10x10x8xf32>
    %83 = vector.extract_strided_slice %82 {offsets = [0, 0, 0, 0], sizes = [1, 8, 8, 8], strides = [1, 1, 1, 1]} : vector<1x10x10x8xf32> to vector<1x8x8x8xf32>
    %84 = vector.shape_cast %83 : vector<1x8x8x8xf32> to vector<64x8xf32>
    %c0_26 = arith.constant 0 : index
    %c0_27 = arith.constant 0 : index
    %85 = vector.load %arg8[%c0_26, %c0_27] : memref<64x72xf32, #tpu.memory_space<vmem>>, vector<64x8xf32>
    tpu.vector_store %arg8[%c0_26, %c0_27], %84 {strides = array<i32>} : memref<64x72xf32, #tpu.memory_space<vmem>>, vector<64x8xf32>,
    %86 = vector.extract_strided_slice %82 {offsets = [0, 0, 1, 0], sizes = [1, 8, 8, 8], strides = [1, 1, 1, 1]} : vector<1x10x10x8xf32> to vector<1x8x8x8xf32>
    %87 = vector.shape_cast %86 : vector<1x8x8x8xf32> to vector<64x8xf32>
    %c0_28 = arith.constant 0 : index
    %c8_29 = arith.constant 8 : index
    %88 = vector.load %arg8[%c0_28, %c8_29] : memref<64x72xf32, #tpu.memory_space<vmem>>, vector<64x8xf32>
    tpu.vector_store %arg8[%c0_28, %c8_29], %87 {strides = array<i32>} : memref<64x72xf32, #tpu.memory_space<vmem>>, vector<64x8xf32>,
    %89 = vector.extract_strided_slice %82 {offsets = [0, 0, 2, 0], sizes = [1, 8, 8, 8], strides = [1, 1, 1, 1]} : vector<1x10x10x8xf32> to vector<1x8x8x8xf32>
    %90 = vector.shape_cast %89 : vector<1x8x8x8xf32> to vector<64x8xf32>
    %c0_30 = arith.constant 0 : index
    %c16_31 = arith.constant 16 : index
    %91 = vector.load %arg8[%c0_30, %c16_31] : memref<64x72xf32, #tpu.memory_space<vmem>>, vector<64x8xf32>
    tpu.vector_store %arg8[%c0_30, %c16_31], %90 {strides = array<i32>} : memref<64x72xf32, #tpu.memory_space<vmem>>, vector<64x8xf32>,
    %92 = vector.extract_strided_slice %82 {offsets = [0, 1, 0, 0], sizes = [1, 8, 8, 8], strides = [1, 1, 1, 1]} : vector<1x10x10x8xf32> to vector<1x8x8x8xf32>
    %93 = vector.shape_cast %92 : vector<1x8x8x8xf32> to vector<64x8xf32>
    %c0_32 = arith.constant 0 : index
    %c24_33 = arith.constant 24 : index
    %94 = vector.load %arg8[%c0_32, %c24_33] : memref<64x72xf32, #tpu.memory_space<vmem>>, vector<64x8xf32>
    tpu.vector_store %arg8[%c0_32, %c24_33], %93 {strides = array<i32>} : memref<64x72xf32, #tpu.memory_space<vmem>>, vector<64x8xf32>,
    %95 = vector.extract_strided_slice %82 {offsets = [0, 1, 1, 0], sizes = [1, 8, 8, 8], strides = [1, 1, 1, 1]} : vector<1x10x10x8xf32> to vector<1x8x8x8xf32>
    %96 = vector.shape_cast %95 : vector<1x8x8x8xf32> to vector<64x8xf32>
    %c0_34 = arith.constant 0 : index
    %c32_35 = arith.constant 32 : index
    %97 = vector.load %arg8[%c0_34, %c32_35] : memref<64x72xf32, #tpu.memory_space<vmem>>, vector<64x8xf32>
    tpu.vector_store %arg8[%c0_34, %c32_35], %96 {strides = array<i32>} : memref<64x72xf32, #tpu.memory_space<vmem>>, vector<64x8xf32>,
    %98 = vector.extract_strided_slice %82 {offsets = [0, 1, 2, 0], sizes = [1, 8, 8, 8], strides = [1, 1, 1, 1]} : vector<1x10x10x8xf32> to vector<1x8x8x8xf32>
    %99 = vector.shape_cast %98 : vector<1x8x8x8xf32> to vector<64x8xf32>
    %c0_36 = arith.constant 0 : index
    %c40 = arith.constant 40 : index
    %100 = vector.load %arg8[%c0_36, %c40] : memref<64x72xf32, #tpu.memory_space<vmem>>, vector<64x8xf32>
    tpu.vector_store %arg8[%c0_36, %c40], %99 {strides = array<i32>} : memref<64x72xf32, #tpu.memory_space<vmem>>, vector<64x8xf32>,
    %101 = vector.extract_strided_slice %82 {offsets = [0, 2, 0, 0], sizes = [1, 8, 8, 8], strides = [1, 1, 1, 1]} : vector<1x10x10x8xf32> to vector<1x8x8x8xf32>
    %102 = vector.shape_cast %101 : vector<1x8x8x8xf32> to vector<64x8xf32>
    %c0_37 = arith.constant 0 : index
    %c48 = arith.constant 48 : index
    %103 = vector.load %arg8[%c0_37, %c48] : memref<64x72xf32, #tpu.memory_space<vmem>>, vector<64x8xf32>
    tpu.vector_store %arg8[%c0_37, %c48], %102 {strides = array<i32>} : memref<64x72xf32, #tpu.memory_space<vmem>>, vector<64x8xf32>,
    %104 = vector.extract_strided_slice %82 {offsets = [0, 2, 1, 0], sizes = [1, 8, 8, 8], strides = [1, 1, 1, 1]} : vector<1x10x10x8xf32> to vector<1x8x8x8xf32>
    %105 = vector.shape_cast %104 : vector<1x8x8x8xf32> to vector<64x8xf32>
    %c0_38 = arith.constant 0 : index
    %c56 = arith.constant 56 : index
    %106 = vector.load %arg8[%c0_38, %c56] : memref<64x72xf32, #tpu.memory_space<vmem>>, vector<64x8xf32>
    tpu.vector_store %arg8[%c0_38, %c56], %105 {strides = array<i32>} : memref<64x72xf32, #tpu.memory_space<vmem>>, vector<64x8xf32>,
    %107 = vector.extract_strided_slice %82 {offsets = [0, 2, 2, 0], sizes = [1, 8, 8, 8], strides = [1, 1, 1, 1]} : vector<1x10x10x8xf32> to vector<1x8x8x8xf32>
    %108 = vector.shape_cast %107 : vector<1x8x8x8xf32> to vector<64x8xf32>
    %c0_39 = arith.constant 0 : index
    %c64 = arith.constant 64 : index
    %109 = vector.load %arg8[%c0_39, %c64] : memref<64x72xf32, #tpu.memory_space<vmem>>, vector<64x8xf32>
    tpu.vector_store %arg8[%c0_39, %c64], %108 {strides = array<i32>} : memref<64x72xf32, #tpu.memory_space<vmem>>, vector<64x8xf32>,
    %c0_40 = arith.constant 0 : index
    %c0_41 = arith.constant 0 : index
    %110 = vector.load %arg8[%c0_40, %c0_41] : memref<64x72xf32, #tpu.memory_space<vmem>>, vector<64x72xf32>
    %111 = arith.truncf %110 : vector<64x72xf32> to vector<64x72xbf16>
    %c0_42 = arith.constant 0 : index
    %c0_43 = arith.constant 0 : index
    %112 = vector.load %arg3[%c0_42, %c0_43] : memref<72x8xbf16, #tpu.memory_space<vmem>>, vector<72x8xbf16>
    %cst_44 = arith.constant dense<0.000000e+00> : vector<64x8xf32>
    %113 = tpu.matmul %111, %112, %cst_44 {dimension_numbers = #tpu.dot_dimension_numbers<[1], [0], [0], [1], [0, 0, 1, 1], [], []>} : vector<64x72xbf16>, vector<72x8xbf16>, vector<64x8xf32> -> vector<64x8xf32>
    %114 = vector.shape_cast %113 : vector<64x8xf32> to vector<1x64x8xf32>
    %cst_45 = arith.constant dense<0.000000e+00> : vector<1x8xf32>
    %115 = vector.multi_reduction <add>, %114, %cst_45 [1] : vector<1x64x8xf32> to vector<1x8xf32>
    %116 = vector.shape_cast %115 : vector<1x8xf32> to vector<1x1x8xf32>
    %117 = arith.mulf %114, %114 : vector<1x64x8xf32>
    %cst_46 = arith.constant dense<0.000000e+00> : vector<1x8xf32>
    %118 = vector.multi_reduction <add>, %117, %cst_46 [1] : vector<1x64x8xf32> to vector<1x8xf32>
    %119 = vector.shape_cast %118 : vector<1x8xf32> to vector<1x1x8xf32>
    %cst_47 = arith.constant 1.562500e-02 : f32
    %120 = vector.broadcast %cst_47 : f32 to vector<1x1x8xf32>
    %121 = arith.mulf %116, %120 : vector<1x1x8xf32>
    %cst_48 = arith.constant 1.562500e-02 : f32
    %122 = vector.broadcast %cst_48 : f32 to vector<1x1x8xf32>
    %123 = arith.mulf %119, %122 : vector<1x1x8xf32>
    %124 = arith.mulf %121, %121 : vector<1x1x8xf32>
    %125 = arith.subf %123, %124 : vector<1x1x8xf32>
    %cst_49 = arith.constant 0.000000e+00 : f32
    %126 = vector.broadcast %cst_49 : f32 to vector<1x1x8xf32>
    %127 = arith.maximumf %125, %126 : vector<1x1x8xf32>
    %128 = vector.broadcast %121 : vector<1x1x8xf32> to vector<1x64x8xf32>
    %129 = arith.subf %114, %128 : vector<1x64x8xf32>
    %cst_50 = arith.constant 9.99999974E-6 : f32
    %130 = vector.broadcast %cst_50 : f32 to vector<1x1x8xf32>
    %131 = arith.addf %127, %130 : vector<1x1x8xf32>
    %132 = math.rsqrt %131 : vector<1x1x8xf32>
    %133 = vector.broadcast %132 : vector<1x1x8xf32> to vector<1x64x8xf32>
    %134 = arith.mulf %129, %133 : vector<1x64x8xf32>
    %135 = vector.shape_cast %134 : vector<1x64x8xf32> to vector<64x8xf32>
    %cst_51 = arith.constant 0.000000e+00 : f32
    %136 = vector.broadcast %cst_51 : f32 to vector<64x8xf32>
    %137 = arith.maximumf %135, %136 : vector<64x8xf32>
    %138 = vector.shape_cast %8 : vector<1x8x8x4xf32> to vector<64x4xf32>
    %139 = arith.truncf %138 : vector<64x4xf32> to vector<64x4xbf16>
    %c0_52 = arith.constant 0 : index
    %c0_53 = arith.constant 0 : index
    %140 = vector.load %arg4[%c0_52, %c0_53] : memref<4x8xbf16, #tpu.memory_space<vmem>>, vector<4x8xbf16>
    %cst_54 = arith.constant dense<0.000000e+00> : vector<64x8xf32>
    %141 = tpu.matmul %139, %140, %cst_54 {dimension_numbers = #tpu.dot_dimension_numbers<[1], [0], [0], [1], [0, 0, 1, 1], [], []>} : vector<64x4xbf16>, vector<4x8xbf16>, vector<64x8xf32> -> vector<64x8xf32>
    %c0_55 = arith.constant 0 : index
    %c0_56 = arith.constant 0 : index
    %142 = vector.load %arg5[%c0_55, %c0_56] : memref<1x8xf32, #tpu.memory_space<vmem>>, vector<1x8xf32>
    %143 = vector.broadcast %142 : vector<1x8xf32> to vector<64x8xf32>
    %144 = arith.addf %141, %143 : vector<64x8xf32>
    %145 = arith.addf %137, %144 : vector<64x8xf32>
    %cst_57 = arith.constant 0.000000e+00 : f32
    %146 = vector.broadcast %cst_57 : f32 to vector<64x8xf32>
    %147 = arith.maximumf %145, %146 : vector<64x8xf32>
    %148 = vector.shape_cast %147 : vector<64x8xf32> to vector<1x64x8xf32>
    %c0_58 = arith.constant 0 : index
    %c0_59 = arith.constant 0 : index
    %c0_60 = arith.constant 0 : index
    %149 = vector.load %arg6[%c0_58, %c0_59, %c0_60] : memref<1x64x8xf32, #tpu.memory_space<vmem>>, vector<1x64x8xf32>
    tpu.vector_store %arg6[%c0_58, %c0_59, %c0_60], %148 {strides = array<i32>} : memref<1x64x8xf32, #tpu.memory_space<vmem>>, vector<1x64x8xf32>,
    return
  }
  func.func @transform_0(%arg0: i32) -> (i32, i32, i32, i32, i32) {
    %c0_i32 = arith.constant 0 : i32
    %c0_i32_0 = arith.constant 0 : i32
    %c0_i32_1 = arith.constant 0 : i32
    %c0_i32_2 = arith.constant 0 : i32
    %c0_i32_3 = arith.constant 0 : i32
    return %arg0, %c0_i32, %c0_i32_0, %c0_i32_1, %c0_i32_2 : i32, i32, i32, i32, i32
  }
  func.func @transform_1(%arg0: i32) -> (i32, i32) {
    %c0_i32 = arith.constant 0 : i32
    %c0_i32_0 = arith.constant 0 : i32
    %c0_i32_1 = arith.constant 0 : i32
    return %c0_i32, %c0_i32_0 : i32, i32
  }
  func.func @transform_2(%arg0: i32) -> (i32, i32) {
    %c0_i32 = arith.constant 0 : i32
    %c0_i32_0 = arith.constant 0 : i32
    %c0_i32_1 = arith.constant 0 : i32
    return %c0_i32, %c0_i32_0 : i32, i32
  }
  func.func @transform_3(%arg0: i32) -> (i32, i32) {
    %c0_i32 = arith.constant 0 : i32
    %c0_i32_0 = arith.constant 0 : i32
    %c0_i32_1 = arith.constant 0 : i32
    return %c0_i32, %c0_i32_0 : i32, i32
  }
  func.func @transform_4(%arg0: i32) -> (i32, i32) {
    %c0_i32 = arith.constant 0 : i32
    %c0_i32_0 = arith.constant 0 : i32
    %c0_i32_1 = arith.constant 0 : i32
    return %c0_i32, %c0_i32_0 : i32, i32
  }
  func.func @transform_5(%arg0: i32) -> (i32, i32, i32) {
    %c0_i32 = arith.constant 0 : i32
    %c0_i32_0 = arith.constant 0 : i32
    %c0_i32_1 = arith.constant 0 : i32
    return %arg0, %c0_i32, %c0_i32_0 : i32, i32, i32
  }
}

</mosaic_0001>

<llo_original>
// kernel: tpu_custom_call.1
$region0: #{tpu_custom_call.1}
  #allocation0 [shape = 'u32[]', space=smem, size = 0x4, offset = 0x4, fixed_abs, tag = 'smem constant byte address 0x4 - core index']
  #allocation1 [shape = 'u32[144,128]{1,0:T(1,128)}', space=vmem, size = 0x12000, scoped, tag = 'internal scratch']
  #allocation2 [shape = 'f32[64,36]{1,0:T(8,128)}', space=vmem, size = 0x8000, scoped, tag = 'scratch operand']
  #allocation3 [shape = 'f32[64,72]{1,0:T(8,128)}', space=vmem, size = 0x8000, scoped, tag = 'scratch operand']
  %s0 = inlined_call_operand.hbm [shape: f32[2,8,2,8,8], index: 0, kind: input, shape index: {}]
  %s1 = inlined_call_operand.hbm [shape: bf16[36,8], index: 1, kind: input, shape index: {}]
  %s2 = inlined_call_operand.hbm [shape: bf16[72,8], index: 2, kind: input, shape index: {}]
  %s3 = inlined_call_operand.hbm [shape: bf16[4,8], index: 3, kind: input, shape index: {}]
  %s4 = inlined_call_operand.hbm [shape: f32[1,8], index: 4, kind: input, shape index: {}]
  %s5 = inlined_call_operand.hbm [shape: f32[2,64,8], index: 5, kind: output, shape index: {}]
  %s6 = sld [smem:[#allocation0]]
  $region73: #{tpu_custom_call.1} parent=0
    _
  %s8 = ssub.s32 1, %s6
  %s9 = scalar_select 0, %s8, %s6
  $region1: #{tpu_custom_call.1} parent=0
    #allocation4 [shape = 'u8[131072]{0}', space=vmem, size = 0x20000, scoped, tag = 'input window, operand 0']
    #allocation5 [shape = 's32[2]{0}', space=sflag, size = 0x8, scoped, tag = 'scoped memory for tpu_custom_call.1']
    #allocation6 [shape = 's32[2]{0}', space=sflag, size = 0x8, scoped, tag = 'scoped memory for tpu_custom_call.1']
    #allocation7 [shape = 'u8[10240]{0}', space=vmem, size = 0x2800, scoped, tag = 'input window, operand 1, single buffered']
    #allocation8 [shape = 's32[1]{0}', space=sflag, size = 0x4, scoped, tag = 'scoped memory for tpu_custom_call.1']
    #allocation9 [shape = 'u8[18432]{0}', space=vmem, size = 0x4800, scoped, tag = 'input window, operand 2, single buffered']
    #allocation10 [shape = 'u8[1024]{0}', space=vmem, size = 0x400, scoped, tag = 'input window, operand 3, single buffered']
    #allocation11 [shape = 's32[1]{0}', space=sflag, size = 0x4, scoped, tag = 'scoped memory for tpu_custom_call.1']
    #allocation12 [shape = 'u8[512]{0}', space=vmem, size = 0x400, scoped, tag = 'input window, operand 4, single buffered']
    #allocation13 [shape = 'u8[65536]{0}', space=vmem, size = 0x10000, scoped, tag = 'output window, operand 0']
    %10 = vsyncpa [#allocation5], 0
    %s11 = scalar_lea.sflag [#allocation5], 1
    %12 = vsyncpa %s11, 0
    %13 = vsyncpa [#allocation8], 0
    %14 = vsyncpa [#allocation11], 0
    %15 = vsyncpa [#allocation6], 0
    %s16 = scalar_lea.sflag [#allocation6], 1
    %17 = vsyncpa %s16, 0
    loop: start=0, step=1, limit=4
    $region2: #{tpu_custom_call.1} parent=1 // loop_pre_header
      _
    $region3: #{tpu_custom_call.1} parent=1 // loop_header
      %s19 = sphi 0, %s23
      %p20 = scmp.ge.s32.totalorder %s19, 4
      %s29 = sphi 0, %s31
      %s32 = sphi 0, %s29
      %s33 = sphi 0, %s32
      %s49 = sphi 0, %s33
      %s53 = sphi 0, %s53
      %s55 = sphi 0, %s53
      %s56 = sphi 0, %s55
      %s70 = sphi 0, %s56
      %s74 = sphi 0, %s74
      %s76 = sphi 0, %s74
      %s77 = sphi 0, %s76
      %s91 = sphi 0, %s77
      %s95 = sphi 0, %s95
      %s97 = sphi 0, %s95
      %s98 = sphi 0, %s97
      %s112 = sphi 0, %s98
      %s116 = sphi 0, %s116
      %s118 = sphi 0, %s116
      %s119 = sphi 0, %s118
      %s133 = sphi 0, %s119
      %s139 = sphi 0, %s141
      %s142 = sphi 0, %s139
      %s143 = sphi 0, %s142
      %s159 = sphi 0, %s143
    $region4: #{tpu_custom_call.1} parent=1 // loop_header_branch
      %22 = sbr.rel (%p20) target = $region8
    $region5: #{tpu_custom_call.1} parent=1 // loop_body
      %s24 = ssub.s32 %s19, 1
      %s25 = ssub.s32 %s19, 2
      %s26 = sadd.s32 %s19, 1
      %s27 = ssub.s32 %s19, %s26
      %p28 = scmp.eq.s32.totalorder %s27, 0
      %s30 = sadd.s32 %s29, 1
      %s31 = scalar_select %p28, %s29, %s30
      %p34 = pneg %p28
      %p35 = scmp.eq.s32.totalorder %s19, 1
      %p36 = por %p34, %p35
      %p37 = scmp.ne.s32.totalorder %s29, %s32
      %p38 = scmp.eq.s32.totalorder %s19, 0
      %p39 = por %p37, %p38
      %p40 = scmp.ne.s32.totalorder %s29, %s32
      %p41 = scmp.eq.s32.totalorder %s24, 1
      %p42 = por %p40, %p41
      %p43 = scmp.ne.s32.totalorder %s32, %s33
      %p44 = scmp.eq.s32.totalorder %s24, 0
      %p45 = por %p43, %p44
      %p46 = scmp.ne.s32.totalorder %s32, %s33
      %p47 = scmp.eq.s32.totalorder %s25, 1
      %p48 = por %p46, %p47
      %p50 = scmp.ne.s32.totalorder %s33, %s49
      %p51 = scmp.eq.s32.totalorder %s25, 0
      %p52 = por %p50, %p51
      %s54 = sadd.s32 %s53, 1
      %p57 = scmp.eq.s32.totalorder %s19, 1
      %p58 = scmp.ne.s32.totalorder %s53, %s55
      %p59 = scmp.eq.s32.totalorder %s19, 0
      %p60 = por %p58, %p59
      %p61 = scmp.ne.s32.totalorder %s53, %s55
      %p62 = scmp.eq.s32.totalorder %s24, 1
      %p63 = por %p61, %p62
      %p64 = scmp.ne.s32.totalorder %s55, %s56
      %p65 = scmp.eq.s32.totalorder %s24, 0
      %p66 = por %p64, %p65
      %p67 = scmp.ne.s32.totalorder %s55, %s56
      %p68 = scmp.eq.s32.totalorder %s25, 1
      %p69 = por %p67, %p68
      %p71 = scmp.ne.s32.totalorder %s56, %s70
      %p72 = scmp.eq.s32.totalorder %s25, 0
      %p73 = por %p71, %p72
      %s75 = sadd.s32 %s74, 1
      %p78 = scmp.eq.s32.totalorder %s19, 1
      %p79 = scmp.ne.s32.totalorder %s74, %s76
      %p80 = scmp.eq.s32.totalorder %s19, 0
      %p81 = por %p79, %p80
      %p82 = scmp.ne.s32.totalorder %s74, %s76
      %p83 = scmp.eq.s32.totalorder %s24, 1
      %p84 = por %p82, %p83
      %p85 = scmp.ne.s32.totalorder %s76, %s77
      %p86 = scmp.eq.s32.totalorder %s24, 0
      %p87 = por %p85, %p86
      %p88 = scmp.ne.s32.totalorder %s76, %s77
      %p89 = scmp.eq.s32.totalorder %s25, 1
      %p90 = por %p88, %p89
      %p92 = scmp.ne.s32.totalorder %s77, %s91
      %p93 = scmp.eq.s32.totalorder %s25, 0
      %p94 = por %p92, %p93
      %s96 = sadd.s32 %s95, 1
      %p99 = scmp.eq.s32.totalorder %s19, 1
      %p100 = scmp.ne.s32.totalorder %s95, %s97
      %p101 = scmp.eq.s32.totalorder %s19, 0
      %p102 = por %p100, %p101
      %p103 = scmp.ne.s32.totalorder %s95, %s97
      %p104 = scmp.eq.s32.totalorder %s24, 1
      %p105 = por %p103, %p104
      %p106 = scmp.ne.s32.totalorder %s97, %s98
      %p107 = scmp.eq.s32.totalorder %s24, 0
      %p108 = por %p106, %p107
      %p109 = scmp.ne.s32.totalorder %s97, %s98
      %p110 = scmp.eq.s32.totalorder %s25, 1
      %p111 = por %p109, %p110
      %p113 = scmp.ne.s32.totalorder %s98, %s112
      %p114 = scmp.eq.s32.totalorder %s25, 0
      %p115 = por %p113, %p114
      %s117 = sadd.s32 %s116, 1
      %p120 = scmp.eq.s32.totalorder %s19, 1
      %p121 = scmp.ne.s32.totalorder %s116, %s118
      %p122 = scmp.eq.s32.totalorder %s19, 0
      %p123 = por %p121, %p122
      %p124 = scmp.ne.s32.totalorder %s116, %s118
      %p125 = scmp.eq.s32.totalorder %s24, 1
      %p126 = por %p124, %p125
      %p127 = scmp.ne.s32.totalorder %s118, %s119
      %p128 = scmp.eq.s32.totalorder %s24, 0
      %p129 = por %p127, %p128
      %p130 = scmp.ne.s32.totalorder %s118, %s119
      %p131 = scmp.eq.s32.totalorder %s25, 1
      %p132 = por %p130, %p131
      %p134 = scmp.ne.s32.totalorder %s119, %s133
      %p135 = scmp.eq.s32.totalorder %s25, 0
      %p136 = por %p134, %p135
      %s137 = ssub.s32 %s19, %s26
      %p138 = scmp.eq.s32.totalorder %s137, 0
      %s140 = sadd.s32 %s139, 1
      %s141 = scalar_select %p138, %s139, %s140
      %p144 = pneg %p138
      %p145 = scmp.eq.s32.totalorder %s19, 1
      %p146 = por %p144, %p145
      %p147 = scmp.ne.s32.totalorder %s139, %s142
      %p148 = scmp.eq.s32.totalorder %s19, 0
      %p149 = por %p147, %p148
      %p150 = scmp.ne.s32.totalorder %s139, %s142
      %p151 = scmp.eq.s32.totalorder %s24, 1
      %p152 = por %p150, %p151
      %p153 = scmp.ne.s32.totalorder %s142, %s143
      %p154 = scmp.eq.s32.totalorder %s24, 0
      %p155 = por %p153, %p154
      %p156 = scmp.ne.s32.totalorder %s142, %s143
      %p157 = scmp.eq.s32.totalorder %s25, 1
      %p158 = por %p156, %p157
      %p160 = scmp.ne.s32.totalorder %s143, %s159
      %p161 = scmp.eq.s32.totalorder %s25, 0
      %p162 = por %p160, %p161
      %p163 = scmp.le.s32.totalorder 1, %s19
      %p164 = scmp.lt.s32.totalorder %s19, 3
      %p165 = pnand %p163, %p164
      %p166 = pneg %p165
      // Predicated region
      $region9: #{tpu_custom_call.1} parent=5 // pred_check
        _
      $region10: #{tpu_custom_call.1} parent=5 // pred_check_branch
        %168 = sbr.rel (%p165) target = $region12
      $region11: #{tpu_custom_call.1} parent=5 // pred_region
        %s169 = ssub.s32 %s19, 1
        // Predicated region
        $region13: #{tpu_custom_call.1} parent=11 // pred_check
          %p170 = pneg %p66
        $region14: #{tpu_custom_call.1} parent=11 // pred_check_branch
          %172 = sbr.rel (%p170) target = $region16
        $region15: #{tpu_custom_call.1} parent=11 // pred_region
          %s174 = ssub.s32 320, 320
          %175 = vsyncadd [#allocation8], %s174
          %s176 = sshll.u32 [#allocation7], 4
          %s177 = int_to_ptr.vmem [resolvable:$true] %s176
          %182 = dma.hbm_to_vmem [thread:$0]  %s1, 320, %s177, [#allocation8], 64, 64, 4
        $region16: #{tpu_custom_call.1} parent=11 // pred_fallthru
          _
        // Predicated region
        $region17: #{tpu_custom_call.1} parent=11 // pred_check
          %p183 = pneg %p87
        $region18: #{tpu_custom_call.1} parent=11 // pred_check_branch
          %185 = sbr.rel (%p183) target = $region20
        $region19: #{tpu_custom_call.1} parent=11 // pred_region
          %s187 = ssub.s32 576, 576
          %188 = vsyncadd [#allocation8], %s187
          %s189 = sshll.u32 [#allocation9], 4
          %s190 = int_to_ptr.vmem [resolvable:$true] %s189
          %195 = dma.hbm_to_vmem [thread:$0]  %s2, 576, %s190, [#allocation8], 64, 64, 4
        $region20: #{tpu_custom_call.1} parent=11 // pred_fallthru
          _
        // Predicated region
        $region21: #{tpu_custom_call.1} parent=11 // pred_check
          %p196 = pneg %p108
        $region22: #{tpu_custom_call.1} parent=11 // pred_check_branch
          %198 = sbr.rel (%p196) target = $region24
        $region23: #{tpu_custom_call.1} parent=11 // pred_region
          %s200 = ssub.s32 32, 32
          %201 = vsyncadd [#allocation11], %s200
          %s203 = sshll.u32 [#allocation10], 4
          %s204 = int_to_ptr.vmem [resolvable:$true] %s203
          %206 = dma.hbm_to_vmem [thread:$0]  %s3, 32, %s204, [#allocation11]
        $region24: #{tpu_custom_call.1} parent=11 // pred_fallthru
          _
        // Predicated region
        $region25: #{tpu_custom_call.1} parent=11 // pred_check
          %p207 = pneg %p129
        $region26: #{tpu_custom_call.1} parent=11 // pred_check_branch
          %209 = sbr.rel (%p207) target = $region28
        $region27: #{tpu_custom_call.1} parent=11 // pred_region
          %s211 = ssub.s32 16, 16
          %212 = vsyncadd [#allocation11], %s211
          %s214 = sshll.u32 [#allocation12], 4
          %s215 = int_to_ptr.vmem [resolvable:$true] %s214
          %217 = dma.hbm_to_vmem [thread:$0]  %s4, 16, %s215, [#allocation11]
        $region28: #{tpu_custom_call.1} parent=11 // pred_fallthru
          _
      $region12: #{tpu_custom_call.1} parent=5 // pred_fallthru
        _
      %p218 = scmp.lt.s32.totalorder %s19, 2
      // Predicated region
      $region29: #{tpu_custom_call.1} parent=5 // pred_check
        %p219 = pneg %p218
      $region30: #{tpu_custom_call.1} parent=5 // pred_check_branch
        %221 = sbr.rel (%p219) target = $region32
      $region31: #{tpu_custom_call.1} parent=5 // pred_region
        // Predicated region
        $region33: #{tpu_custom_call.1} parent=31 // pred_check
          %p222 = pneg %p39
        $region34: #{tpu_custom_call.1} parent=31 // pred_check_branch
          %224 = sbr.rel (%p222) target = $region36
        $region35: #{tpu_custom_call.1} parent=31 // pred_region
          %s225 = sand.u32 %s29, 1
          %s226 = scalar_lea.sflag [#allocation5], %s225
          %s227 = sand.u32 %s29, 1
          %s228 = smul.addr %s227, 128
          %s229 = scalar_lea.vmem [#allocation4], %s228
          %s231 = ssub.s32 2048, 2048
          %232 = vsyncadd %s226, %s231
          %s233 = smul.addr %s19, 16
          %s234 = smul.addr %s233, 128
          %s235 = scalar_lea.hbm %s0, %s234
          %s236 = sshll.u32 %s229, 4
          %s237 = int_to_ptr.vmem [resolvable:$true] %s236
          %242 = dma.hbm_to_vmem [thread:$0]  %s235, 2048, %s237, %s226, 128, 128, 8
        $region36: #{tpu_custom_call.1} parent=31 // pred_fallthru
          _
      $region32: #{tpu_custom_call.1} parent=5 // pred_fallthru
        _
      %p243 = scmp.le.s32.totalorder 1, %s19
      %p244 = scmp.lt.s32.totalorder %s19, 3
      %p245 = pnand %p243, %p244
      %p246 = pneg %p245
      // Predicated region
      $region37: #{tpu_custom_call.1} parent=5 // pred_check
        _
      $region38: #{tpu_custom_call.1} parent=5 // pred_check_branch
        %248 = sbr.rel (%p245) target = $region40
      $region39: #{tpu_custom_call.1} parent=5 // pred_region
        %s249 = ssub.s32 %s19, 1
        %s250 = sand.u32 %s32, 1
        %s251 = scalar_lea.sflag [#allocation5], %s250
        %s252 = sand.u32 %s32, 1
        %s253 = smul.addr %s252, 128
        %s254 = scalar_lea.vmem [#allocation4], %s253
        // Predicated region
        $region41: #{tpu_custom_call.1} parent=39 // pred_check
          %p255 = pneg %p45
        $region42: #{tpu_custom_call.1} parent=39 // pred_check_branch
          %257 = sbr.rel (%p255) target = $region44
        $region43: #{tpu_custom_call.1} parent=39 // pred_region
          %258 = dma.done %s251, 2048
        $region44: #{tpu_custom_call.1} parent=39 // pred_fallthru
          _
        // Predicated region
        $region45: #{tpu_custom_call.1} parent=39 // pred_check
          %p259 = pneg %p66
        $region46: #{tpu_custom_call.1} parent=39 // pred_check_branch
          %261 = sbr.rel (%p259) target = $region48
        $region47: #{tpu_custom_call.1} parent=39 // pred_region
          %262 = dma.done [#allocation8], 320
        $region48: #{tpu_custom_call.1} parent=39 // pred_fallthru
          _
        // Predicated region
        $region49: #{tpu_custom_call.1} parent=39 // pred_check
          %p263 = pneg %p87
        $region50: #{tpu_custom_call.1} parent=39 // pred_check_branch
          %265 = sbr.rel (%p263) target = $region52
        $region51: #{tpu_custom_call.1} parent=39 // pred_region
          %266 = dma.done [#allocation8], 576
        $region52: #{tpu_custom_call.1} parent=39 // pred_fallthru
          _
        // Predicated region
        $region53: #{tpu_custom_call.1} parent=39 // pred_check
          %p267 = pneg %p108
        $region54: #{tpu_custom_call.1} parent=39 // pred_check_branch
          %269 = sbr.rel (%p267) target = $region56
        $region55: #{tpu_custom_call.1} parent=39 // pred_region
          %270 = dma.done [#allocation11], 32
        $region56: #{tpu_custom_call.1} parent=39 // pred_fallthru
          _
        // Predicated region
        $region57: #{tpu_custom_call.1} parent=39 // pred_check
          %p271 = pneg %p129
        $region58: #{tpu_custom_call.1} parent=39 // pred_check_branch
          %273 = sbr.rel (%p271) target = $region60
        $region59: #{tpu_custom_call.1} parent=39 // pred_region
          %274 = dma.done [#allocation11], 16
        $region60: #{tpu_custom_call.1} parent=39 // pred_fallthru
          _
        %s275 = sand.u32 %s32, 1
        %s276 = scalar_lea.sflag [#allocation5], %s275
        %s277 = sand.u32 %s32, 1
        %s278 = smul.addr %s277, 128
        %s279 = scalar_lea.vmem [#allocation4], %s278
        %p280 = pneg %p45
        %p281 = pneg %p42
        %p282 = pneg %p66
        %p283 = pneg %p63
        %p284 = pneg %p87
        %p285 = pneg %p84
        %p286 = pneg %p108
        %p287 = pneg %p105
        %p288 = pneg %p129
        %p289 = pneg %p126
        %p290 = pneg %p155
        %p291 = pneg %p152
        %s292 = sand.u32 %s142, 1
        %s293 = scalar_lea.sflag [#allocation6], %s292
        %s294 = sand.u32 %s142, 1
        %s295 = smul.addr %s294, 64
        %s296 = scalar_lea.vmem [#allocation13], %s295
        %v298 = vld [vmem:[%s254] sm:$0xff]
        %v299 = vld [vmem:[%s254 + $0x8] sm:$0xff]
        %v300 = vld [vmem:[%s254 + $0x10] sm:$0xff]
        %v301 = vld [vmem:[%s254 + $0x18] sm:$0xff]
        %v302 = vld [vmem:[%s254 + $0x20] sm:$0xff]
        %v303 = vld [vmem:[%s254 + $0x28] sm:$0xff]
        %v304 = vld [vmem:[%s254 + $0x30] sm:$0xff]
        %v305 = vld [vmem:[%s254 + $0x38] sm:$0xff]
        %v306 = vld [vmem:[%s254 + $0x40] sm:$0xff]
        %v307 = vld [vmem:[%s254 + $0x48] sm:$0xff]
        %v308 = vld [vmem:[%s254 + $0x50] sm:$0xff]
        %v309 = vld [vmem:[%s254 + $0x58] sm:$0xff]
        %v310 = vld [vmem:[%s254 + $0x60] sm:$0xff]
        %v311 = vld [vmem:[%s254 + $0x68] sm:$0xff]
        %v312 = vld [vmem:[%s254 + $0x70] sm:$0xff]
        %v313 = vld [vmem:[%s254 + $0x78] sm:$0xff]
        %v314 = vmax.f32 %v298, %v299
        %v315 = vmax.f32 %v300, %v301
        %v316 = vmax.f32 %v302, %v303
        %v317 = vmax.f32 %v304, %v305
        %v318 = vmax.f32 %v306, %v307
        %v319 = vmax.f32 %v308, %v309
        %v320 = vmax.f32 %v310, %v311
        %v321 = vmax.f32 %v312, %v313
        %330 = vrot.lane.b32.xlu0 %v314, 124
        %v331 = vpop.permute.xlu0 %330
        %332 = vrot.lane.b32.xlu0 %v315, 124
        %v333 = vpop.permute.xlu0 %332
        %334 = vrot.lane.b32.xlu0 %v316, 124
        %v335 = vpop.permute.xlu0 %334
        %336 = vrot.lane.b32.xlu0 %v317, 124
        %v337 = vpop.permute.xlu0 %336
        %338 = vrot.lane.b32.xlu0 %v318, 124
        %v339 = vpop.permute.xlu0 %338
        %340 = vrot.lane.b32.xlu0 %v319, 124
        %v341 = vpop.permute.xlu0 %340
        %342 = vrot.lane.b32.xlu0 %v320, 124
        %v343 = vpop.permute.xlu0 %342
        %344 = vrot.lane.b32.xlu0 %v321, 124
        %v345 = vpop.permute.xlu0 %344
        %v354 = vmax.f32 %v314, %v331
        %v355 = vmax.f32 %v315, %v333
        %v356 = vmax.f32 %v316, %v335
        %v357 = vmax.f32 %v317, %v337
        %v358 = vmax.f32 %v318, %v339
        %v359 = vmax.f32 %v319, %v341
        %v360 = vmax.f32 %v320, %v343
        %v361 = vmax.f32 %v321, %v345
        %v371 = vrot.slane 0.0, 7
        %v372 = vrot.slane %v354, 7
        %v373 = vrot.slane %v355, 7
        %v374 = vrot.slane %v356, 7
        %v375 = vrot.slane %v357, 7
        %v376 = vrot.slane %v358, 7
        %v377 = vrot.slane %v359, 7
        %v378 = vrot.slane %v360, 7
        %v379 = vrot.slane %v361, 7
        %vm389 = vcmask 1040384
        %v390 = vsel %vm389, 0.0, %v371
        %v391 = vsel %vm389, 0.0, %v372
        %v392 = vsel %vm389, 0.0, %v373
        %v393 = vsel %vm389, 0.0, %v374
        %v394 = vsel %vm389, 0.0, %v375
        %v395 = vsel %vm389, 0.0, %v376
        %v396 = vsel %vm389, 0.0, %v377
        %v397 = vsel %vm389, 0.0, %v378
        %v398 = vsel %vm389, 0.0, %v379
        %v399 = vsel %vm389, %v371, 0.0
        %v400 = vsel %vm389, %v372, 0.0
        %v401 = vsel %vm389, %v373, 0.0
        %v402 = vsel %vm389, %v374, 0.0
        %v403 = vsel %vm389, %v375, 0.0
        %v404 = vsel %vm389, %v376, 0.0
        %v405 = vsel %vm389, %v377, 0.0
        %v406 = vsel %vm389, %v378, 0.0
        %v407 = vsel %vm389, %v379, 0.0
        %vm408 = vcmask 31744
        %409 = vst.msk [vmem:[#allocation2] sm:$0xff] %vm408, %v390
        %410 = vst.msk [vmem:[#allocation2 + $0x8] sm:$0xff] %vm408, %v391
        %411 = vst.msk [vmem:[#allocation2 + $0x10] sm:$0xff] %vm408, %v392
        %412 = vst.msk [vmem:[#allocation2 + $0x18] sm:$0xff] %vm408, %v393
        %413 = vst.msk [vmem:[#allocation2 + $0x20] sm:$0xff] %vm408, %v394
        %414 = vst.msk [vmem:[#allocation2 + $0x28] sm:$0xff] %vm408, %v395
        %415 = vst.msk [vmem:[#allocation2 + $0x30] sm:$0xff] %vm408, %v396
        %416 = vst.msk [vmem:[#allocation2 + $0x38] sm:$0xff] %vm408, %v397
        %vm433 = vcmask 1046528
        %v434 = vrot.slane %v390, 1
        %v435 = vrot.slane %v399, 1
        %v436 = vsel %vm433, %v434, %v435
        %v437 = vrot.slane %v391, 1
        %v438 = vrot.slane %v400, 1
        %v439 = vsel %vm433, %v437, %v438
        %v440 = vrot.slane %v392, 1
        %v441 = vrot.slane %v401, 1
        %v442 = vsel %vm433, %v440, %v441
        %v443 = vrot.slane %v393, 1
        %v444 = vrot.slane %v402, 1
        %v445 = vsel %vm433, %v443, %v444
        %v446 = vrot.slane %v394, 1
        %v447 = vrot.slane %v403, 1
        %v448 = vsel %vm433, %v446, %v447
        %v449 = vrot.slane %v395, 1
        %v450 = vrot.slane %v404, 1
        %v451 = vsel %vm433, %v449, %v450
        %v452 = vrot.slane %v396, 1
        %v453 = vrot.slane %v405, 1
        %v454 = vsel %vm433, %v452, %v453
        %v455 = vrot.slane %v397, 1
        %v456 = vrot.slane %v406, 1
        %v457 = vsel %vm433, %v455, %v456
        %458 = vrot.lane.b32.xlu0 %v436, 4
        %v459 = vpop.permute.xlu0 %458
        %460 = vrot.lane.b32.xlu0 %v439, 4
        %v461 = vpop.permute.xlu0 %460
        %462 = vrot.lane.b32.xlu0 %v442, 4
        %v463 = vpop.permute.xlu0 %462
        %464 = vrot.lane.b32.xlu0 %v445, 4
        %v465 = vpop.permute.xlu0 %464
        %466 = vrot.lane.b32.xlu0 %v448, 4
        %v467 = vpop.permute.xlu0 %466
        %468 = vrot.lane.b32.xlu0 %v451, 4
        %v469 = vpop.permute.xlu0 %468
        %470 = vrot.lane.b32.xlu0 %v454, 4
        %v471 = vpop.permute.xlu0 %470
        %472 = vrot.lane.b32.xlu0 %v457, 4
        %v473 = vpop.permute.xlu0 %472
        %vm482 = vcmask 64544
        %483 = vst.msk [vmem:[#allocation2] sm:$0xff] %vm482, %v459
        %484 = vst.msk [vmem:[#allocation2 + $0x8] sm:$0xff] %vm482, %v461
        %485 = vst.msk [vmem:[#allocation2 + $0x10] sm:$0xff] %vm482, %v463
        %486 = vst.msk [vmem:[#allocation2 + $0x18] sm:$0xff] %vm482, %v465
        %487 = vst.msk [vmem:[#allocation2 + $0x20] sm:$0xff] %vm482, %v467
        %488 = vst.msk [vmem:[#allocation2 + $0x28] sm:$0xff] %vm482, %v469
        %489 = vst.msk [vmem:[#allocation2 + $0x30] sm:$0xff] %vm482, %v471
        %490 = vst.msk [vmem:[#allocation2 + $0x38] sm:$0xff] %vm482, %v473
        %vm491 = vcmask 1045504
        %v492 = vrot.slane %v390, 2
        %v493 = vrot.slane %v399, 2
        %v494 = vsel %vm491, %v492, %v493
        %v495 = vrot.slane %v391, 2
        %v496 = vrot.slane %v400, 2
        %v497 = vsel %vm491, %v495, %v496
        %v498 = vrot.slane %v392, 2
        %v499 = vrot.slane %v401, 2
        %v500 = vsel %vm491, %v498, %v499
        %v501 = vrot.slane %v393, 2
        %v502 = vrot.slane %v402, 2
        %v503 = vsel %vm491, %v501, %v502
        %v504 = vrot.slane %v394, 2
        %v505 = vrot.slane %v403, 2
        %v506 = vsel %vm491, %v504, %v505
        %v507 = vrot.slane %v395, 2
        %v508 = vrot.slane %v404, 2
        %v509 = vsel %vm491, %v507, %v508
        %v510 = vrot.slane %v396, 2
        %v511 = vrot.slane %v405, 2
        %v512 = vsel %vm491, %v510, %v511
        %v513 = vrot.slane %v397, 2
        %v514 = vrot.slane %v406, 2
        %v515 = vsel %vm491, %v513, %v514
        %516 = vrot.lane.b32.xlu0 %v494, 8
        %v517 = vpop.permute.xlu0 %516
        %518 = vrot.lane.b32.xlu0 %v497, 8
        %v519 = vpop.permute.xlu0 %518
        %520 = vrot.lane.b32.xlu0 %v500, 8
        %v521 = vpop.permute.xlu0 %520
        %522 = vrot.lane.b32.xlu0 %v503, 8
        %v523 = vpop.permute.xlu0 %522
        %524 = vrot.lane.b32.xlu0 %v506, 8
        %v525 = vpop.permute.xlu0 %524
        %526 = vrot.lane.b32.xlu0 %v509, 8
        %v527 = vpop.permute.xlu0 %526
        %528 = vrot.lane.b32.xlu0 %v512, 8
        %v529 = vpop.permute.xlu0 %528
        %530 = vrot.lane.b32.xlu0 %v515, 8
        %v531 = vpop.permute.xlu0 %530
        %vm540 = vcmask 97344
        %541 = vst.msk [vmem:[#allocation2] sm:$0xff] %vm540, %v517
        %542 = vst.msk [vmem:[#allocation2 + $0x8] sm:$0xff] %vm540, %v519
        %543 = vst.msk [vmem:[#allocation2 + $0x10] sm:$0xff] %vm540, %v521
        %544 = vst.msk [vmem:[#allocation2 + $0x18] sm:$0xff] %vm540, %v523
        %545 = vst.msk [vmem:[#allocation2 + $0x20] sm:$0xff] %vm540, %v525
        %546 = vst.msk [vmem:[#allocation2 + $0x28] sm:$0xff] %vm540, %v527
        %547 = vst.msk [vmem:[#allocation2 + $0x30] sm:$0xff] %vm540, %v529
        %548 = vst.msk [vmem:[#allocation2 + $0x38] sm:$0xff] %vm540, %v531
        %550 = vrot.lane.b32.xlu0 %v391, 12
        %v551 = vpop.permute.xlu0 %550
        %552 = vrot.lane.b32.xlu0 %v392, 12
        %v553 = vpop.permute.xlu0 %552
        %554 = vrot.lane.b32.xlu0 %v393, 12
        %v555 = vpop.permute.xlu0 %554
        %556 = vrot.lane.b32.xlu0 %v394, 12
        %v557 = vpop.permute.xlu0 %556
        %558 = vrot.lane.b32.xlu0 %v395, 12
        %v559 = vpop.permute.xlu0 %558
        %560 = vrot.lane.b32.xlu0 %v396, 12
        %v561 = vpop.permute.xlu0 %560
        %562 = vrot.lane.b32.xlu0 %v397, 12
        %v563 = vpop.permute.xlu0 %562
        %564 = vrot.lane.b32.xlu0 %v398, 12
        %v565 = vpop.permute.xlu0 %564
        %vm574 = vcmask 130144
        %575 = vst.msk [vmem:[#allocation2] sm:$0xff] %vm574, %v551
        %576 = vst.msk [vmem:[#allocation2 + $0x8] sm:$0xff] %vm574, %v553
        %577 = vst.msk [vmem:[#allocation2 + $0x10] sm:$0xff] %vm574, %v555
        %578 = vst.msk [vmem:[#allocation2 + $0x18] sm:$0xff] %vm574, %v557
        %579 = vst.msk [vmem:[#allocation2 + $0x20] sm:$0xff] %vm574, %v559
        %580 = vst.msk [vmem:[#allocation2 + $0x28] sm:$0xff] %vm574, %v561
        %581 = vst.msk [vmem:[#allocation2 + $0x30] sm:$0xff] %vm574, %v563
        %582 = vst.msk [vmem:[#allocation2 + $0x38] sm:$0xff] %vm574, %v565
        %v584 = vrot.slane %v398, 1
        %v585 = vrot.slane %v407, 1
        %v586 = vsel %vm433, %v584, %v585
        %587 = vrot.lane.b32.xlu0 %v439, 16
        %v588 = vpop.permute.xlu0 %587
        %589 = vrot.lane.b32.xlu0 %v442, 16
        %v590 = vpop.permute.xlu0 %589
        %591 = vrot.lane.b32.xlu0 %v445, 16
        %v592 = vpop.permute.xlu0 %591
        %593 = vrot.lane.b32.xlu0 %v448, 16
        %v594 = vpop.permute.xlu0 %593
        %595 = vrot.lane.b32.xlu0 %v451, 16
        %v596 = vpop.permute.xlu0 %595
        %597 = vrot.lane.b32.xlu0 %v454, 16
        %v598 = vpop.permute.xlu0 %597
        %599 = vrot.lane.b32.xlu0 %v457, 16
        %v600 = vpop.permute.xlu0 %599
        %601 = vrot.lane.b32.xlu0 %v586, 16
        %v602 = vpop.permute.xlu0 %601
        %vm611 = vcmask 162944
        %612 = vst.msk [vmem:[#allocation2] sm:$0xff] %vm611, %v588
        %613 = vst.msk [vmem:[#allocation2 + $0x8] sm:$0xff] %vm611, %v590
        %614 = vst.msk [vmem:[#allocation2 + $0x10] sm:$0xff] %vm611, %v592
        %615 = vst.msk [vmem:[#allocation2 + $0x18] sm:$0xff] %vm611, %v594
        %616 = vst.msk [vmem:[#allocation2 + $0x20] sm:$0xff] %vm611, %v596
        %617 = vst.msk [vmem:[#allocation2 + $0x28] sm:$0xff] %vm611, %v598
        %618 = vst.msk [vmem:[#allocation2 + $0x30] sm:$0xff] %vm611, %v600
        %619 = vst.msk [vmem:[#allocation2 + $0x38] sm:$0xff] %vm611, %v602
        %v620 = vrot.slane %v398, 2
        %v621 = vrot.slane %v407, 2
        %v622 = vsel %vm491, %v620, %v621
        %623 = vrot.lane.b32.xlu0 %v497, 20
        %v624 = vpop.permute.xlu0 %623
        %625 = vrot.lane.b32.xlu0 %v500, 20
        %v626 = vpop.permute.xlu0 %625
        %627 = vrot.lane.b32.xlu0 %v503, 20
        %v628 = vpop.permute.xlu0 %627
        %629 = vrot.lane.b32.xlu0 %v506, 20
        %v630 = vpop.permute.xlu0 %629
        %631 = vrot.lane.b32.xlu0 %v509, 20
        %v632 = vpop.permute.xlu0 %631
        %633 = vrot.lane.b32.xlu0 %v512, 20
        %v634 = vpop.permute.xlu0 %633
        %635 = vrot.lane.b32.xlu0 %v515, 20
        %v636 = vpop.permute.xlu0 %635
        %637 = vrot.lane.b32.xlu0 %v622, 20
        %v638 = vpop.permute.xlu0 %637
        %vm647 = vcmask 195744
        %648 = vst.msk [vmem:[#allocation2] sm:$0xff] %vm647, %v624
        %649 = vst.msk [vmem:[#allocation2 + $0x8] sm:$0xff] %vm647, %v626
        %650 = vst.msk [vmem:[#allocation2 + $0x10] sm:$0xff] %vm647, %v628
        %651 = vst.msk [vmem:[#allocation2 + $0x18] sm:$0xff] %vm647, %v630
        %652 = vst.msk [vmem:[#allocation2 + $0x20] sm:$0xff] %vm647, %v632
        %653 = vst.msk [vmem:[#allocation2 + $0x28] sm:$0xff] %vm647, %v634
        %654 = vst.msk [vmem:[#allocation2 + $0x30] sm:$0xff] %vm647, %v636
        %655 = vst.msk [vmem:[#allocation2 + $0x38] sm:$0xff] %vm647, %v638
        %656 = vrot.lane.b32.xlu0 %v392, 24
        %v657 = vpop.permute.xlu0 %656
        %658 = vrot.lane.b32.xlu0 %v393, 24
        %v659 = vpop.permute.xlu0 %658
        %660 = vrot.lane.b32.xlu0 %v394, 24
        %v661 = vpop.permute.xlu0 %660
        %662 = vrot.lane.b32.xlu0 %v395, 24
        %v663 = vpop.permute.xlu0 %662
        %664 = vrot.lane.b32.xlu0 %v396, 24
        %v665 = vpop.permute.xlu0 %664
        %666 = vrot.lane.b32.xlu0 %v397, 24
        %v667 = vpop.permute.xlu0 %666
        %668 = vrot.lane.b32.xlu0 %v398, 24
        %v669 = vpop.permute.xlu0 %668
        %670 = vrot.lane.b32.xlu0 %v390, 24
        %v671 = vpop.permute.xlu0 %670
        %vm680 = vcmask 228544
        %681 = vst.msk [vmem:[#allocation2] sm:$0xff] %vm680, %v657
        %682 = vst.msk [vmem:[#allocation2 + $0x8] sm:$0xff] %vm680, %v659
        %683 = vst.msk [vmem:[#allocation2 + $0x10] sm:$0xff] %vm680, %v661
        %684 = vst.msk [vmem:[#allocation2 + $0x18] sm:$0xff] %vm680, %v663
        %685 = vst.msk [vmem:[#allocation2 + $0x20] sm:$0xff] %vm680, %v665
        %686 = vst.msk [vmem:[#allocation2 + $0x28] sm:$0xff] %vm680, %v667
        %687 = vst.msk [vmem:[#allocation2 + $0x30] sm:$0xff] %vm680, %v669
        %688 = vst.msk [vmem:[#allocation2 + $0x38] sm:$0xff] %vm680, %v671
        %689 = vrot.lane.b32.xlu0 %v442, 28
        %v690 = vpop.permute.xlu0 %689
        %691 = vrot.lane.b32.xlu0 %v445, 28
        %v692 = vpop.permute.xlu0 %691
        %693 = vrot.lane.b32.xlu0 %v448, 28
        %v694 = vpop.permute.xlu0 %693
        %695 = vrot.lane.b32.xlu0 %v451, 28
        %v696 = vpop.permute.xlu0 %695
        %697 = vrot.lane.b32.xlu0 %v454, 28
        %v698 = vpop.permute.xlu0 %697
        %699 = vrot.lane.b32.xlu0 %v457, 28
        %v700 = vpop.permute.xlu0 %699
        %701 = vrot.lane.b32.xlu0 %v586, 28
        %v702 = vpop.permute.xlu0 %701
        %703 = vrot.lane.b32.xlu0 %v436, 28
        %v704 = vpop.permute.xlu0 %703
        %vm713 = vcmask 261344
        %714 = vst.msk [vmem:[#allocation2] sm:$0xff] %vm713, %v690
        %715 = vst.msk [vmem:[#allocation2 + $0x8] sm:$0xff] %vm713, %v692
        %716 = vst.msk [vmem:[#allocation2 + $0x10] sm:$0xff] %vm713, %v694
        %717 = vst.msk [vmem:[#allocation2 + $0x18] sm:$0xff] %vm713, %v696
        %718 = vst.msk [vmem:[#allocation2 + $0x20] sm:$0xff] %vm713, %v698
        %719 = vst.msk [vmem:[#allocation2 + $0x28] sm:$0xff] %vm713, %v700
        %720 = vst.msk [vmem:[#allocation2 + $0x30] sm:$0xff] %vm713, %v702
        %721 = vst.msk [vmem:[#allocation2 + $0x38] sm:$0xff] %vm713, %v704
        %722 = vrot.lane.b32.xlu0 %v500, 32
        %v723 = vpop.permute.xlu0 %722
        %724 = vrot.lane.b32.xlu0 %v503, 32
        %v725 = vpop.permute.xlu0 %724
        %726 = vrot.lane.b32.xlu0 %v506, 32
        %v727 = vpop.permute.xlu0 %726
        %728 = vrot.lane.b32.xlu0 %v509, 32
        %v729 = vpop.permute.xlu0 %728
        %730 = vrot.lane.b32.xlu0 %v512, 32
        %v731 = vpop.permute.xlu0 %730
        %732 = vrot.lane.b32.xlu0 %v515, 32
        %v733 = vpop.permute.xlu0 %732
        %734 = vrot.lane.b32.xlu0 %v622, 32
        %v735 = vpop.permute.xlu0 %734
        %736 = vrot.lane.b32.xlu0 %v494, 32
        %v737 = vpop.permute.xlu0 %736
        %vm746 = vcmask 294144
        %747 = vst.msk [vmem:[#allocation2] sm:$0xff] %vm746, %v723
        %748 = vst.msk [vmem:[#allocation2 + $0x8] sm:$0xff] %vm746, %v725
        %749 = vst.msk [vmem:[#allocation2 + $0x10] sm:$0xff] %vm746, %v727
        %750 = vst.msk [vmem:[#allocation2 + $0x18] sm:$0xff] %vm746, %v729
        %751 = vst.msk [vmem:[#allocation2 + $0x20] sm:$0xff] %vm746, %v731
        %752 = vst.msk [vmem:[#allocation2 + $0x28] sm:$0xff] %vm746, %v733
        %753 = vst.msk [vmem:[#allocation2 + $0x30] sm:$0xff] %vm746, %v735
        %754 = vst.msk [vmem:[#allocation2 + $0x38] sm:$0xff] %vm746, %v737
        %v755 = vld [vmem:[#allocation2] sm:$0xff]
        %v756 = vld [vmem:[#allocation2 + $0x8] sm:$0xff]
        %v757 = vld [vmem:[#allocation2 + $0x10] sm:$0xff]
        %v758 = vld [vmem:[#allocation2 + $0x18] sm:$0xff]
        %v759 = vld [vmem:[#allocation2 + $0x20] sm:$0xff]
        %v760 = vld [vmem:[#allocation2 + $0x28] sm:$0xff]
        %v761 = vld [vmem:[#allocation2 + $0x30] sm:$0xff]
        %v762 = vld [vmem:[#allocation2 + $0x38] sm:$0xff]
        %v763 = vpack.c.bf16 %v756, %v755
        %v764 = vpack.c.bf16 %v758, %v757
        %v765 = vpack.c.bf16 %v760, %v759
        %v766 = vpack.c.bf16 %v762, %v761
        %v767 = vld [vmem:[#allocation7] sm:$0xf]
        %v768 = vld [vmem:[#allocation7 + $0x4] sm:$0xf]
        %v769 = vld [vmem:[#allocation7 + $0x8] sm:$0xf]
        %v770 = vld [vmem:[#allocation7 + $0xc] sm:$0xf]
        %v771 = vld [vmem:[#allocation7 + $0x10] sm:$0x3]
        %v777 = vunpack.c.l.b16 %v767
        %v778 = vunpack.c.l.b16 %v768
        %v779 = vunpack.c.l.b16 %v769
        %v780 = vunpack.c.l.b16 %v770
        %v781 = vunpack.c.l.b16 %v771
        %v782 = vpack.c.b16 %v778, %v777
        %v783 = vpack.c.b16 %v780, %v779
        %v784 = vpack.c.b16 %v781, %v781
        %vm787 = vcmask 293888
        %v789 = vsel %vm787, %v763, 0
        %v792 = vsel %vm787, %v764, 0
        %v795 = vsel %vm787, %v765, 0
        %v798 = vsel %vm787, %v766, 0
        %vm800 = vcmask 1041408
        %v802 = vsel %vm800, %v784, 0
        %804 = vmatprep.subr.bf16.mxu0 0
        %805 = vmatpush1.bf16.msra.mxu0 %v782
        %806 = vmatprep.subr.bf16.mxu0 0
        %807 = vmatpush1.bf16.msra.mxu0 %v783
        %808 = vmatprep.subr.bf16.mxu0 0
        %809 = vmatpush1.bf16.msra.mxu0 %v802
        %810 = vmatprep.subr.bf16.mxu0 0
        %811 = vmatpush1.bf16.msra.mxu0 0
        %812 = vmatprep.subr.bf16.mxu0 0
        %813 = vmatpush1.bf16.msra.mxu0 0
        %814 = vmatprep.subr.bf16.mxu0 0
        %815 = vmatpush1.bf16.msra.mxu0 0
        %816 = vmatprep.subr.bf16.mxu0 0
        %817 = vmatpush1.bf16.msra.mxu0 0
        %818 = vmatprep.subr.bf16.mxu0 0
        %819 = vmatpush1.bf16.msra.mxu0 0
        %820 = vmatprep.subr.bf16.mxu0 0
        %821 = vmatpush1.bf16.msra.mxu0 0
        %822 = vmatprep.subr.bf16.mxu0 0
        %823 = vmatpush1.bf16.msra.mxu0 0
        %824 = vmatprep.subr.bf16.mxu0 0
        %825 = vmatpush1.bf16.msra.mxu0 0
        %826 = vmatprep.subr.bf16.mxu0 0
        %827 = vmatpush1.bf16.msra.mxu0 0
        %828 = vmatprep.subr.bf16.mxu0 0
        %829 = vmatpush1.bf16.msra.mxu0 0
        %830 = vmatprep.subr.bf16.mxu0 0
        %831 = vmatpush1.bf16.msra.mxu0 0
        %832 = vmatprep.subr.bf16.mxu0 0
        %833 = vmatpush1.bf16.msra.mxu0 0
        %834 = vmatprep.subr.bf16.mxu0 0
        %835 = vmatpush1.bf16.msra.mxu0 0
        %836 = vmatprep.mubr.bf16.mxu0 0
        %837 = vmatmul.mubr.bf16.gmra.mrb[0].mxu0 %v789
        %v838 = vpop.f32.mrb[0].mxu0
        %v839 = vadd.f32 0.0, %v838
        %v840 = vpop.f32.mrb[0].mxu0
        %v841 = vpop.f32.mrb[0].mxu0
        %v842 = vadd.f32 0.0, %v841
        %v843 = vpop.f32.mrb[0].mxu0
        %844 = vmatprep.mubr.bf16.mxu0 0
        %845 = vmatmul.mubr.bf16.gmra.mrb[0].mxu0 %v792
        %v846 = vpop.f32.mrb[0].mxu0
        %v847 = vadd.f32 0.0, %v846
        %v848 = vpop.f32.mrb[0].mxu0
        %v849 = vpop.f32.mrb[0].mxu0
        %v850 = vadd.f32 0.0, %v849
        %v851 = vpop.f32.mrb[0].mxu0
        %852 = vmatprep.mubr.bf16.mxu0 0
        %853 = vmatmul.mubr.bf16.gmra.mrb[0].mxu0 %v795
        %v854 = vpop.f32.mrb[0].mxu0
        %v855 = vadd.f32 0.0, %v854
        %v856 = vpop.f32.mrb[0].mxu0
        %v857 = vpop.f32.mrb[0].mxu0
        %v858 = vadd.f32 0.0, %v857
        %v859 = vpop.f32.mrb[0].mxu0
        %860 = vmatprep.mubr.bf16.mxu0 0
        %861 = vmatmul.mubr.bf16.gmra.mrb[0].mxu0 %v798
        %v862 = vpop.f32.mrb[0].mxu0
        %v863 = vadd.f32 0.0, %v862
        %v864 = vpop.f32.mrb[0].mxu0
        %v865 = vpop.f32.mrb[0].mxu0
        %v866 = vadd.f32 0.0, %v865
        %v867 = vpop.f32.mrb[0].mxu0
        %868 = vdwg.mxu0
        %vm869 = vcmask 64512
        %v870 = vsel %vm869, %v839, 0.0
        %v871 = vsel %vm869, %v842, 0.0
        %v872 = vadd.f32 %v870, %v871
        %v873 = vsel %vm869, %v847, 0.0
        %v874 = vadd.f32 %v872, %v873
        %v875 = vsel %vm869, %v850, 0.0
        %v876 = vadd.f32 %v874, %v875
        %v877 = vsel %vm869, %v855, 0.0
        %v878 = vadd.f32 %v876, %v877
        %v879 = vsel %vm869, %v858, 0.0
        %v880 = vadd.f32 %v878, %v879
        %v881 = vsel %vm869, %v863, 0.0
        %v882 = vadd.f32 %v880, %v881
        %v883 = vsel %vm869, %v866, 0.0
        %v884 = vadd.f32 %v882, %v883
        %v885 = vrot.slane %v884, 4
        %v886 = vadd.f32 %v884, %v885
        %v887 = vrot.slane %v886, 2
        %v888 = vadd.f32 %v886, %v887
        %v889 = vrot.slane %v888, 1
        %v890 = vadd.f32 %v888, %v889
        %v891 = vmul.f32 %v839, %v839
        %v892 = vmul.f32 %v842, %v842
        %v893 = vmul.f32 %v847, %v847
        %v894 = vmul.f32 %v850, %v850
        %v895 = vmul.f32 %v855, %v855
        %v896 = vmul.f32 %v858, %v858
        %v897 = vmul.f32 %v863, %v863
        %v898 = vmul.f32 %v866, %v866
        %v899 = vsel %vm869, %v891, 0.0
        %v900 = vsel %vm869, %v892, 0.0
        %v901 = vadd.f32 %v899, %v900
        %v902 = vsel %vm869, %v893, 0.0
        %v903 = vadd.f32 %v901, %v902
        %v904 = vsel %vm869, %v894, 0.0
        %v905 = vadd.f32 %v903, %v904
        %v906 = vsel %vm869, %v895, 0.0
        %v907 = vadd.f32 %v905, %v906
        %v908 = vsel %vm869, %v896, 0.0
        %v909 = vadd.f32 %v907, %v908
        %v910 = vsel %vm869, %v897, 0.0
        %v911 = vadd.f32 %v909, %v910
        %v912 = vsel %vm869, %v898, 0.0
        %v913 = vadd.f32 %v911, %v912
        %v914 = vrot.slane %v913, 4
        %v915 = vadd.f32 %v913, %v914
        %v916 = vrot.slane %v915, 2
        %v917 = vadd.f32 %v915, %v916
        %v918 = vrot.slane %v917, 1
        %v919 = vadd.f32 %v917, %v918
        %v920 = vmul.f32 %v890, 0.015625
        %v921 = vmul.f32 %v919, 0.015625
        %v922 = vmul.f32 %v920, %v920
        %v923 = vsub.f32 %v921, %v922
        %v924 = vmax.f32 %v923, 0.0
        %v925 = vsub.f32 %v839, %v920
        %v926 = vsub.f32 %v842, %v920
        %v927 = vsub.f32 %v847, %v920
        %v928 = vsub.f32 %v850, %v920
        %v929 = vsub.f32 %v855, %v920
        %v930 = vsub.f32 %v858, %v920
        %v931 = vsub.f32 %v863, %v920
        %v932 = vsub.f32 %v866, %v920
        %v933 = vadd.f32 %v924, 1e-05
        %v934 = vrsqrt.pop %v933
        %v935 = vmul.f32 %v925, %v934
        %v936 = vmul.f32 %v926, %v934
        %v937 = vmul.f32 %v927, %v934
        %v938 = vmul.f32 %v928, %v934
        %v939 = vmul.f32 %v929, %v934
        %v940 = vmul.f32 %v930, %v934
        %v941 = vmul.f32 %v931, %v934
        %v942 = vmul.f32 %v932, %v934
        %v943 = vmax.f32 %v935, 0.0
        %v944 = vmax.f32 %v936, 0.0
        %v945 = vmax.f32 %v937, 0.0
        %v946 = vmax.f32 %v938, 0.0
        %v947 = vmax.f32 %v939, 0.0
        %v948 = vmax.f32 %v940, 0.0
        %v949 = vmax.f32 %v941, 0.0
        %v950 = vmax.f32 %v942, 0.0
        %v959 = vrot.slane %v943, 7
        %v960 = vrot.slane %v944, 7
        %v961 = vrot.slane %v945, 7
        %v962 = vrot.slane %v946, 7
        %v963 = vrot.slane %v947, 7
        %v964 = vrot.slane %v948, 7
        %v965 = vrot.slane %v949, 7
        %v966 = vrot.slane %v950, 7
        %v975 = vsel %vm389, 0.0, %v959
        %v976 = vsel %vm389, 0.0, %v960
        %v977 = vsel %vm389, 0.0, %v961
        %v978 = vsel %vm389, 0.0, %v962
        %v979 = vsel %vm389, 0.0, %v963
        %v980 = vsel %vm389, 0.0, %v964
        %v981 = vsel %vm389, 0.0, %v965
        %v982 = vsel %vm389, 0.0, %v966
        %v983 = vsel %vm389, %v959, 0.0
        %v984 = vsel %vm389, %v960, 0.0
        %v985 = vsel %vm389, %v961, 0.0
        %v986 = vsel %vm389, %v962, 0.0
        %v987 = vsel %vm389, %v963, 0.0
        %v988 = vsel %vm389, %v964, 0.0
        %v989 = vsel %vm389, %v965, 0.0
        %v990 = vsel %vm389, %v966, 0.0
        %991 = vst.msk [vmem:[#allocation3] sm:$0xff] %vm869, %v390
        %992 = vst.msk [vmem:[#allocation3 + $0x8] sm:$0xff] %vm869, %v975
        %993 = vst.msk [vmem:[#allocation3 + $0x10] sm:$0xff] %vm869, %v976
        %994 = vst.msk [vmem:[#allocation3 + $0x18] sm:$0xff] %vm869, %v977
        %995 = vst.msk [vmem:[#allocation3 + $0x20] sm:$0xff] %vm869, %v978
        %996 = vst.msk [vmem:[#allocation3 + $0x28] sm:$0xff] %vm869, %v979
        %997 = vst.msk [vmem:[#allocation3 + $0x30] sm:$0xff] %vm869, %v980
        %998 = vst.msk [vmem:[#allocation3 + $0x38] sm:$0xff] %vm869, %v981
        %v1013 = vrot.slane %v975, 1
        %v1014 = vrot.slane %v983, 1
        %v1015 = vsel %vm433, %v1013, %v1014
        %v1016 = vrot.slane %v976, 1
        %v1017 = vrot.slane %v984, 1
        %v1018 = vsel %vm433, %v1016, %v1017
        %v1019 = vrot.slane %v977, 1
        %v1020 = vrot.slane %v985, 1
        %v1021 = vsel %vm433, %v1019, %v1020
        %v1022 = vrot.slane %v978, 1
        %v1023 = vrot.slane %v986, 1
        %v1024 = vsel %vm433, %v1022, %v1023
        %v1025 = vrot.slane %v979, 1
        %v1026 = vrot.slane %v987, 1
        %v1027 = vsel %vm433, %v1025, %v1026
        %v1028 = vrot.slane %v980, 1
        %v1029 = vrot.slane %v988, 1
        %v1030 = vsel %vm433, %v1028, %v1029
        %v1031 = vrot.slane %v981, 1
        %v1032 = vrot.slane %v989, 1
        %v1033 = vsel %vm433, %v1031, %v1032
        %1034 = vrot.lane.b32.xlu0 %v436, 8
        %v1035 = vpop.permute.xlu0 %1034
        %1036 = vrot.lane.b32.xlu0 %v1015, 8
        %v1037 = vpop.permute.xlu0 %1036
        %1038 = vrot.lane.b32.xlu0 %v1018, 8
        %v1039 = vpop.permute.xlu0 %1038
        %1040 = vrot.lane.b32.xlu0 %v1021, 8
        %v1041 = vpop.permute.xlu0 %1040
        %1042 = vrot.lane.b32.xlu0 %v1024, 8
        %v1043 = vpop.permute.xlu0 %1042
        %1044 = vrot.lane.b32.xlu0 %v1027, 8
        %v1045 = vpop.permute.xlu0 %1044
        %1046 = vrot.lane.b32.xlu0 %v1030, 8
        %v1047 = vpop.permute.xlu0 %1046
        %1048 = vrot.lane.b32.xlu0 %v1033, 8
        %v1049 = vpop.permute.xlu0 %1048
        %vm1058 = vcmask 130112
        %1059 = vst.msk [vmem:[#allocation3] sm:$0xff] %vm1058, %v1035
        %1060 = vst.msk [vmem:[#allocation3 + $0x8] sm:$0xff] %vm1058, %v1037
        %1061 = vst.msk [vmem:[#allocation3 + $0x10] sm:$0xff] %vm1058, %v1039
        %1062 = vst.msk [vmem:[#allocation3 + $0x18] sm:$0xff] %vm1058, %v1041
        %1063 = vst.msk [vmem:[#allocation3 + $0x20] sm:$0xff] %vm1058, %v1043
        %1064 = vst.msk [vmem:[#allocation3 + $0x28] sm:$0xff] %vm1058, %v1045
        %1065 = vst.msk [vmem:[#allocation3 + $0x30] sm:$0xff] %vm1058, %v1047
        %1066 = vst.msk [vmem:[#allocation3 + $0x38] sm:$0xff] %vm1058, %v1049
        %v1067 = vrot.slane %v975, 2
        %v1068 = vrot.slane %v983, 2
        %v1069 = vsel %vm491, %v1067, %v1068
        %v1070 = vrot.slane %v976, 2
        %v1071 = vrot.slane %v984, 2
        %v1072 = vsel %vm491, %v1070, %v1071
        %v1073 = vrot.slane %v977, 2
        %v1074 = vrot.slane %v985, 2
        %v1075 = vsel %vm491, %v1073, %v1074
        %v1076 = vrot.slane %v978, 2
        %v1077 = vrot.slane %v986, 2
        %v1078 = vsel %vm491, %v1076, %v1077
        %v1079 = vrot.slane %v979, 2
        %v1080 = vrot.slane %v987, 2
        %v1081 = vsel %vm491, %v1079, %v1080
        %v1082 = vrot.slane %v980, 2
        %v1083 = vrot.slane %v988, 2
        %v1084 = vsel %vm491, %v1082, %v1083
        %v1085 = vrot.slane %v981, 2
        %v1086 = vrot.slane %v989, 2
        %v1087 = vsel %vm491, %v1085, %v1086
        %1088 = vrot.lane.b32.xlu0 %v494, 16
        %v1089 = vpop.permute.xlu0 %1088
        %1090 = vrot.lane.b32.xlu0 %v1069, 16
        %v1091 = vpop.permute.xlu0 %1090
        %1092 = vrot.lane.b32.xlu0 %v1072, 16
        %v1093 = vpop.permute.xlu0 %1092
        %1094 = vrot.lane.b32.xlu0 %v1075, 16
        %v1095 = vpop.permute.xlu0 %1094
        %1096 = vrot.lane.b32.xlu0 %v1078, 16
        %v1097 = vpop.permute.xlu0 %1096
        %1098 = vrot.lane.b32.xlu0 %v1081, 16
        %v1099 = vpop.permute.xlu0 %1098
        %1100 = vrot.lane.b32.xlu0 %v1084, 16
        %v1101 = vpop.permute.xlu0 %1100
        %1102 = vrot.lane.b32.xlu0 %v1087, 16
        %v1103 = vpop.permute.xlu0 %1102
        %vm1112 = vcmask 195712
        %1113 = vst.msk [vmem:[#allocation3] sm:$0xff] %vm1112, %v1089
        %1114 = vst.msk [vmem:[#allocation3 + $0x8] sm:$0xff] %vm1112, %v1091
        %1115 = vst.msk [vmem:[#allocation3 + $0x10] sm:$0xff] %vm1112, %v1093
        %1116 = vst.msk [vmem:[#allocation3 + $0x18] sm:$0xff] %vm1112, %v1095
        %1117 = vst.msk [vmem:[#allocation3 + $0x20] sm:$0xff] %vm1112, %v1097
        %1118 = vst.msk [vmem:[#allocation3 + $0x28] sm:$0xff] %vm1112, %v1099
        %1119 = vst.msk [vmem:[#allocation3 + $0x30] sm:$0xff] %vm1112, %v1101
        %1120 = vst.msk [vmem:[#allocation3 + $0x38] sm:$0xff] %vm1112, %v1103
        %1122 = vrot.lane.b32.xlu0 %v975, 24
        %v1123 = vpop.permute.xlu0 %1122
        %1124 = vrot.lane.b32.xlu0 %v976, 24
        %v1125 = vpop.permute.xlu0 %1124
        %1126 = vrot.lane.b32.xlu0 %v977, 24
        %v1127 = vpop.permute.xlu0 %1126
        %1128 = vrot.lane.b32.xlu0 %v978, 24
        %v1129 = vpop.permute.xlu0 %1128
        %1130 = vrot.lane.b32.xlu0 %v979, 24
        %v1131 = vpop.permute.xlu0 %1130
        %1132 = vrot.lane.b32.xlu0 %v980, 24
        %v1133 = vpop.permute.xlu0 %1132
        %1134 = vrot.lane.b32.xlu0 %v981, 24
        %v1135 = vpop.permute.xlu0 %1134
        %1136 = vrot.lane.b32.xlu0 %v982, 24
        %v1137 = vpop.permute.xlu0 %1136
        %vm1146 = vcmask 261312
        %1147 = vst.msk [vmem:[#allocation3] sm:$0xff] %vm1146, %v1123
        %1148 = vst.msk [vmem:[#allocation3 + $0x8] sm:$0xff] %vm1146, %v1125
        %1149 = vst.msk [vmem:[#allocation3 + $0x10] sm:$0xff] %vm1146, %v1127
        %1150 = vst.msk [vmem:[#allocation3 + $0x18] sm:$0xff] %vm1146, %v1129
        %1151 = vst.msk [vmem:[#allocation3 + $0x20] sm:$0xff] %vm1146, %v1131
        %1152 = vst.msk [vmem:[#allocation3 + $0x28] sm:$0xff] %vm1146, %v1133
        %1153 = vst.msk [vmem:[#allocation3 + $0x30] sm:$0xff] %vm1146, %v1135
        %1154 = vst.msk [vmem:[#allocation3 + $0x38] sm:$0xff] %vm1146, %v1137
        %v1156 = vrot.slane %v982, 1
        %v1157 = vrot.slane %v990, 1
        %v1158 = vsel %vm433, %v1156, %v1157
        %1159 = vrot.lane.b32.xlu0 %v1015, 32
        %v1160 = vpop.permute.xlu0 %1159
        %1161 = vrot.lane.b32.xlu0 %v1018, 32
        %v1162 = vpop.permute.xlu0 %1161
        %1163 = vrot.lane.b32.xlu0 %v1021, 32
        %v1164 = vpop.permute.xlu0 %1163
        %1165 = vrot.lane.b32.xlu0 %v1024, 32
        %v1166 = vpop.permute.xlu0 %1165
        %1167 = vrot.lane.b32.xlu0 %v1027, 32
        %v1168 = vpop.permute.xlu0 %1167
        %1169 = vrot.lane.b32.xlu0 %v1030, 32
        %v1170 = vpop.permute.xlu0 %1169
        %1171 = vrot.lane.b32.xlu0 %v1033, 32
        %v1172 = vpop.permute.xlu0 %1171
        %1173 = vrot.lane.b32.xlu0 %v1158, 32
        %v1174 = vpop.permute.xlu0 %1173
        %vm1183 = vcmask 326912
        %1184 = vst.msk [vmem:[#allocation3] sm:$0xff] %vm1183, %v1160
        %1185 = vst.msk [vmem:[#allocation3 + $0x8] sm:$0xff] %vm1183, %v1162
        %1186 = vst.msk [vmem:[#allocation3 + $0x10] sm:$0xff] %vm1183, %v1164
        %1187 = vst.msk [vmem:[#allocation3 + $0x18] sm:$0xff] %vm1183, %v1166
        %1188 = vst.msk [vmem:[#allocation3 + $0x20] sm:$0xff] %vm1183, %v1168
        %1189 = vst.msk [vmem:[#allocation3 + $0x28] sm:$0xff] %vm1183, %v1170
        %1190 = vst.msk [vmem:[#allocation3 + $0x30] sm:$0xff] %vm1183, %v1172
        %1191 = vst.msk [vmem:[#allocation3 + $0x38] sm:$0xff] %vm1183, %v1174
        %v1192 = vrot.slane %v982, 2
        %v1193 = vrot.slane %v990, 2
        %v1194 = vsel %vm491, %v1192, %v1193
        %1195 = vrot.lane.b32.xlu0 %v1069, 40
        %v1196 = vpop.permute.xlu0 %1195
        %1197 = vrot.lane.b32.xlu0 %v1072, 40
        %v1198 = vpop.permute.xlu0 %1197
        %1199 = vrot.lane.b32.xlu0 %v1075, 40
        %v1200 = vpop.permute.xlu0 %1199
        %1201 = vrot.lane.b32.xlu0 %v1078, 40
        %v1202 = vpop.permute.xlu0 %1201
        %1203 = vrot.lane.b32.xlu0 %v1081, 40
        %v1204 = vpop.permute.xlu0 %1203
        %1205 = vrot.lane.b32.xlu0 %v1084, 40
        %v1206 = vpop.permute.xlu0 %1205
        %1207 = vrot.lane.b32.xlu0 %v1087, 40
        %v1208 = vpop.permute.xlu0 %1207
        %1209 = vrot.lane.b32.xlu0 %v1194, 40
        %v1210 = vpop.permute.xlu0 %1209
        %vm1219 = vcmask 392512
        %1220 = vst.msk [vmem:[#allocation3] sm:$0xff] %vm1219, %v1196
        %1221 = vst.msk [vmem:[#allocation3 + $0x8] sm:$0xff] %vm1219, %v1198
        %1222 = vst.msk [vmem:[#allocation3 + $0x10] sm:$0xff] %vm1219, %v1200
        %1223 = vst.msk [vmem:[#allocation3 + $0x18] sm:$0xff] %vm1219, %v1202
        %1224 = vst.msk [vmem:[#allocation3 + $0x20] sm:$0xff] %vm1219, %v1204
        %1225 = vst.msk [vmem:[#allocation3 + $0x28] sm:$0xff] %vm1219, %v1206
        %1226 = vst.msk [vmem:[#allocation3 + $0x30] sm:$0xff] %vm1219, %v1208
        %1227 = vst.msk [vmem:[#allocation3 + $0x38] sm:$0xff] %vm1219, %v1210
        %1228 = vrot.lane.b32.xlu0 %v976, 48
        %v1229 = vpop.permute.xlu0 %1228
        %1230 = vrot.lane.b32.xlu0 %v977, 48
        %v1231 = vpop.permute.xlu0 %1230
        %1232 = vrot.lane.b32.xlu0 %v978, 48
        %v1233 = vpop.permute.xlu0 %1232
        %1234 = vrot.lane.b32.xlu0 %v979, 48
        %v1235 = vpop.permute.xlu0 %1234
        %1236 = vrot.lane.b32.xlu0 %v980, 48
        %v1237 = vpop.permute.xlu0 %1236
        %1238 = vrot.lane.b32.xlu0 %v981, 48
        %v1239 = vpop.permute.xlu0 %1238
        %1240 = vrot.lane.b32.xlu0 %v982, 48
        %v1241 = vpop.permute.xlu0 %1240
        %1242 = vrot.lane.b32.xlu0 %v390, 48
        %v1243 = vpop.permute.xlu0 %1242
        %vm1252 = vcmask 458112
        %1253 = vst.msk [vmem:[#allocation3] sm:$0xff] %vm1252, %v1229
        %1254 = vst.msk [vmem:[#allocation3 + $0x8] sm:$0xff] %vm1252, %v1231
        %1255 = vst.msk [vmem:[#allocation3 + $0x10] sm:$0xff] %vm1252, %v1233
        %1256 = vst.msk [vmem:[#allocation3 + $0x18] sm:$0xff] %vm1252, %v1235
        %1257 = vst.msk [vmem:[#allocation3 + $0x20] sm:$0xff] %vm1252, %v1237
        %1258 = vst.msk [vmem:[#allocation3 + $0x28] sm:$0xff] %vm1252, %v1239
        %1259 = vst.msk [vmem:[#allocation3 + $0x30] sm:$0xff] %vm1252, %v1241
        %1260 = vst.msk [vmem:[#allocation3 + $0x38] sm:$0xff] %vm1252, %v1243
        %1261 = vrot.lane.b32.xlu0 %v1018, 56
        %v1262 = vpop.permute.xlu0 %1261
        %1263 = vrot.lane.b32.xlu0 %v1021, 56
        %v1264 = vpop.permute.xlu0 %1263
        %1265 = vrot.lane.b32.xlu0 %v1024, 56
        %v1266 = vpop.permute.xlu0 %1265
        %1267 = vrot.lane.b32.xlu0 %v1027, 56
        %v1268 = vpop.permute.xlu0 %1267
        %1269 = vrot.lane.b32.xlu0 %v1030, 56
        %v1270 = vpop.permute.xlu0 %1269
        %1271 = vrot.lane.b32.xlu0 %v1033, 56
        %v1272 = vpop.permute.xlu0 %1271
        %1273 = vrot.lane.b32.xlu0 %v1158, 56
        %v1274 = vpop.permute.xlu0 %1273
        %1275 = vrot.lane.b32.xlu0 %v436, 56
        %v1276 = vpop.permute.xlu0 %1275
        %vm1285 = vcmask 523712
        %1286 = vst.msk [vmem:[#allocation3] sm:$0xff] %vm1285, %v1262
        %1287 = vst.msk [vmem:[#allocation3 + $0x8] sm:$0xff] %vm1285, %v1264
        %1288 = vst.msk [vmem:[#allocation3 + $0x10] sm:$0xff] %vm1285, %v1266
        %1289 = vst.msk [vmem:[#allocation3 + $0x18] sm:$0xff] %vm1285, %v1268
        %1290 = vst.msk [vmem:[#allocation3 + $0x20] sm:$0xff] %vm1285, %v1270
        %1291 = vst.msk [vmem:[#allocation3 + $0x28] sm:$0xff] %vm1285, %v1272
        %1292 = vst.msk [vmem:[#allocation3 + $0x30] sm:$0xff] %vm1285, %v1274
        %1293 = vst.msk [vmem:[#allocation3 + $0x38] sm:$0xff] %vm1285, %v1276
        %1294 = vrot.lane.b32.xlu0 %v1072, 64
        %v1295 = vpop.permute.xlu0 %1294
        %1296 = vrot.lane.b32.xlu0 %v1075, 64
        %v1297 = vpop.permute.xlu0 %1296
        %1298 = vrot.lane.b32.xlu0 %v1078, 64
        %v1299 = vpop.permute.xlu0 %1298
        %1300 = vrot.lane.b32.xlu0 %v1081, 64
        %v1301 = vpop.permute.xlu0 %1300
        %1302 = vrot.lane.b32.xlu0 %v1084, 64
        %v1303 = vpop.permute.xlu0 %1302
        %1304 = vrot.lane.b32.xlu0 %v1087, 64
        %v1305 = vpop.permute.xlu0 %1304
        %1306 = vrot.lane.b32.xlu0 %v1194, 64
        %v1307 = vpop.permute.xlu0 %1306
        %1308 = vrot.lane.b32.xlu0 %v494, 64
        %v1309 = vpop.permute.xlu0 %1308
        %vm1318 = vcmask 589312
        %1319 = vst.msk [vmem:[#allocation3] sm:$0xff] %vm1318, %v1295
        %1320 = vst.msk [vmem:[#allocation3 + $0x8] sm:$0xff] %vm1318, %v1297
        %1321 = vst.msk [vmem:[#allocation3 + $0x10] sm:$0xff] %vm1318, %v1299
        %1322 = vst.msk [vmem:[#allocation3 + $0x18] sm:$0xff] %vm1318, %v1301
        %1323 = vst.msk [vmem:[#allocation3 + $0x20] sm:$0xff] %vm1318, %v1303
        %1324 = vst.msk [vmem:[#allocation3 + $0x28] sm:$0xff] %vm1318, %v1305
        %1325 = vst.msk [vmem:[#allocation3 + $0x30] sm:$0xff] %vm1318, %v1307
        %1326 = vst.msk [vmem:[#allocation3 + $0x38] sm:$0xff] %vm1318, %v1309
        %v1327 = vld [vmem:[#allocation3] sm:$0xff]
        %v1328 = vld [vmem:[#allocation3 + $0x8] sm:$0xff]
        %v1329 = vld [vmem:[#allocation3 + $0x10] sm:$0xff]
        %v1330 = vld [vmem:[#allocation3 + $0x18] sm:$0xff]
        %v1331 = vld [vmem:[#allocation3 + $0x20] sm:$0xff]
        %v1332 = vld [vmem:[#allocation3 + $0x28] sm:$0xff]
        %v1333 = vld [vmem:[#allocation3 + $0x30] sm:$0xff]
        %v1334 = vld [vmem:[#allocation3 + $0x38] sm:$0xff]
        %v1335 = vpack.c.bf16 %v1328, %v1327
        %v1336 = vpack.c.bf16 %v1330, %v1329
        %v1337 = vpack.c.bf16 %v1332, %v1331
        %v1338 = vpack.c.bf16 %v1334, %v1333
        %v1339 = vld [vmem:[#allocation9] sm:$0xf]
        %v1340 = vld [vmem:[#allocation9 + $0x4] sm:$0xf]
        %v1341 = vld [vmem:[#allocation9 + $0x8] sm:$0xf]
        %v1342 = vld [vmem:[#allocation9 + $0xc] sm:$0xf]
        %v1343 = vld [vmem:[#allocation9 + $0x10] sm:$0xf]
        %v1344 = vld [vmem:[#allocation9 + $0x14] sm:$0xf]
        %v1345 = vld [vmem:[#allocation9 + $0x18] sm:$0xf]
        %v1346 = vld [vmem:[#allocation9 + $0x1c] sm:$0xf]
        %v1347 = vld [vmem:[#allocation9 + $0x20] sm:$0xf]
        %v1357 = vunpack.c.l.b16 %v1339
        %v1358 = vunpack.c.l.b16 %v1340
        %v1359 = vunpack.c.l.b16 %v1341
        %v1360 = vunpack.c.l.b16 %v1342
        %v1361 = vunpack.c.l.b16 %v1343
        %v1362 = vunpack.c.l.b16 %v1344
        %v1363 = vunpack.c.l.b16 %v1345
        %v1364 = vunpack.c.l.b16 %v1346
        %v1365 = vunpack.c.l.b16 %v1347
        %v1366 = vpack.c.b16 %v1358, %v1357
        %v1367 = vpack.c.b16 %v1360, %v1359
        %v1368 = vpack.c.b16 %v1362, %v1361
        %v1369 = vpack.c.b16 %v1364, %v1363
        %v1370 = vpack.c.b16 %v1365, %v1365
        %vm1375 = vcmask 588800
        %v1377 = vsel %vm1375, %v1335, 0
        %v1380 = vsel %vm1375, %v1336, 0
        %v1383 = vsel %vm1375, %v1337, 0
        %v1386 = vsel %vm1375, %v1338, 0
        %vm1388 = vcmask 1043456
        %v1390 = vsel %vm1388, %v1370, 0
        %1392 = vmatprep.subr.bf16.mxu0 0
        %1393 = vmatpush1.bf16.msra.mxu0 %v1366
        %1394 = vmatprep.subr.bf16.mxu0 0
        %1395 = vmatpush1.bf16.msra.mxu0 %v1367
        %1396 = vmatprep.subr.bf16.mxu0 0
        %1397 = vmatpush1.bf16.msra.mxu0 %v1368
        %1398 = vmatprep.subr.bf16.mxu0 0
        %1399 = vmatpush1.bf16.msra.mxu0 %v1369
        %1400 = vmatprep.subr.bf16.mxu0 0
        %1401 = vmatpush1.bf16.msra.mxu0 %v1390
        %1402 = vmatprep.subr.bf16.mxu0 0
        %1403 = vmatpush1.bf16.msra.mxu0 0
        %1404 = vmatprep.subr.bf16.mxu0 0
        %1405 = vmatpush1.bf16.msra.mxu0 0
        %1406 = vmatprep.subr.bf16.mxu0 0
        %1407 = vmatpush1.bf16.msra.mxu0 0
        %1408 = vmatprep.subr.bf16.mxu0 0
        %1409 = vmatpush1.bf16.msra.mxu0 0
        %1410 = vmatprep.subr.bf16.mxu0 0
        %1411 = vmatpush1.bf16.msra.mxu0 0
        %1412 = vmatprep.subr.bf16.mxu0 0
        %1413 = vmatpush1.bf16.msra.mxu0 0
        %1414 = vmatprep.subr.bf16.mxu0 0
        %1415 = vmatpush1.bf16.msra.mxu0 0
        %1416 = vmatprep.subr.bf16.mxu0 0
        %1417 = vmatpush1.bf16.msra.mxu0 0
        %1418 = vmatprep.subr.bf16.mxu0 0
        %1419 = vmatpush1.bf16.msra.mxu0 0
        %1420 = vmatprep.subr.bf16.mxu0 0
        %1421 = vmatpush1.bf16.msra.mxu0 0
        %1422 = vmatprep.subr.bf16.mxu0 0
        %1423 = vmatpush1.bf16.msra.mxu0 0
        %1424 = vmatprep.mubr.bf16.mxu0 0
        %1425 = vmatmul.mubr.bf16.gmra.mrb[0].mxu0 %v1377
        %v1426 = vpop.f32.mrb[0].mxu0
        %v1427 = vadd.f32 0.0, %v1426
        %v1428 = vpop.f32.mrb[0].mxu0
        %v1429 = vpop.f32.mrb[0].mxu0
        %v1430 = vadd.f32 0.0, %v1429
        %v1431 = vpop.f32.mrb[0].mxu0
        %1432 = vmatprep.mubr.bf16.mxu0 0
        %1433 = vmatmul.mubr.bf16.gmra.mrb[0].mxu0 %v1380
        %v1434 = vpop.f32.mrb[0].mxu0
        %v1435 = vadd.f32 0.0, %v1434
        %v1436 = vpop.f32.mrb[0].mxu0
        %v1437 = vpop.f32.mrb[0].mxu0
        %v1438 = vadd.f32 0.0, %v1437
        %v1439 = vpop.f32.mrb[0].mxu0
        %1440 = vmatprep.mubr.bf16.mxu0 0
        %1441 = vmatmul.mubr.bf16.gmra.mrb[0].mxu0 %v1383
        %v1442 = vpop.f32.mrb[0].mxu0
        %v1443 = vadd.f32 0.0, %v1442
        %v1444 = vpop.f32.mrb[0].mxu0
        %v1445 = vpop.f32.mrb[0].mxu0
        %v1446 = vadd.f32 0.0, %v1445
        %v1447 = vpop.f32.mrb[0].mxu0
        %1448 = vmatprep.mubr.bf16.mxu0 0
        %1449 = vmatmul.mubr.bf16.gmra.mrb[0].mxu0 %v1386
        %v1450 = vpop.f32.mrb[0].mxu0
        %v1451 = vadd.f32 0.0, %v1450
        %v1452 = vpop.f32.mrb[0].mxu0
        %v1453 = vpop.f32.mrb[0].mxu0
        %v1454 = vadd.f32 0.0, %v1453
        %v1455 = vpop.f32.mrb[0].mxu0
        %1456 = vdwg.mxu0
        %v1457 = vsel %vm869, %v1427, 0.0
        %v1458 = vsel %vm869, %v1430, 0.0
        %v1459 = vadd.f32 %v1457, %v1458
        %v1460 = vsel %vm869, %v1435, 0.0
        %v1461 = vadd.f32 %v1459, %v1460
        %v1462 = vsel %vm869, %v1438, 0.0
        %v1463 = vadd.f32 %v1461, %v1462
        %v1464 = vsel %vm869, %v1443, 0.0
        %v1465 = vadd.f32 %v1463, %v1464
        %v1466 = vsel %vm869, %v1446, 0.0
        %v1467 = vadd.f32 %v1465, %v1466
        %v1468 = vsel %vm869, %v1451, 0.0
        %v1469 = vadd.f32 %v1467, %v1468
        %v1470 = vsel %vm869, %v1454, 0.0
        %v1471 = vadd.f32 %v1469, %v1470
        %v1472 = vrot.slane %v1471, 4
        %v1473 = vadd.f32 %v1471, %v1472
        %v1474 = vrot.slane %v1473, 2
        %v1475 = vadd.f32 %v1473, %v1474
        %v1476 = vrot.slane %v1475, 1
        %v1477 = vadd.f32 %v1475, %v1476
        %v1478 = vmul.f32 %v1427, %v1427
        %v1479 = vmul.f32 %v1430, %v1430
        %v1480 = vmul.f32 %v1435, %v1435
        %v1481 = vmul.f32 %v1438, %v1438
        %v1482 = vmul.f32 %v1443, %v1443
        %v1483 = vmul.f32 %v1446, %v1446
        %v1484 = vmul.f32 %v1451, %v1451
        %v1485 = vmul.f32 %v1454, %v1454
        %v1486 = vsel %vm869, %v1478, 0.0
        %v1487 = vsel %vm869, %v1479, 0.0
        %v1488 = vadd.f32 %v1486, %v1487
        %v1489 = vsel %vm869, %v1480, 0.0
        %v1490 = vadd.f32 %v1488, %v1489
        %v1491 = vsel %vm869, %v1481, 0.0
        %v1492 = vadd.f32 %v1490, %v1491
        %v1493 = vsel %vm869, %v1482, 0.0
        %v1494 = vadd.f32 %v1492, %v1493
        %v1495 = vsel %vm869, %v1483, 0.0
        %v1496 = vadd.f32 %v1494, %v1495
        %v1497 = vsel %vm869, %v1484, 0.0
        %v1498 = vadd.f32 %v1496, %v1497
        %v1499 = vsel %vm869, %v1485, 0.0
        %v1500 = vadd.f32 %v1498, %v1499
        %v1501 = vrot.slane %v1500, 4
        %v1502 = vadd.f32 %v1500, %v1501
        %v1503 = vrot.slane %v1502, 2
        %v1504 = vadd.f32 %v1502, %v1503
        %v1505 = vrot.slane %v1504, 1
        %v1506 = vadd.f32 %v1504, %v1505
        %v1507 = vmul.f32 %v1477, 0.015625
        %v1508 = vmul.f32 %v1506, 0.015625
        %v1509 = vmul.f32 %v1507, %v1507
        %v1510 = vsub.f32 %v1508, %v1509
        %v1511 = vmax.f32 %v1510, 0.0
        %v1512 = vsub.f32 %v1427, %v1507
        %v1513 = vsub.f32 %v1430, %v1507
        %v1514 = vsub.f32 %v1435, %v1507
        %v1515 = vsub.f32 %v1438, %v1507
        %v1516 = vsub.f32 %v1443, %v1507
        %v1517 = vsub.f32 %v1446, %v1507
        %v1518 = vsub.f32 %v1451, %v1507
        %v1519 = vsub.f32 %v1454, %v1507
        %v1520 = vadd.f32 %v1511, 1e-05
        %v1521 = vrsqrt.pop %v1520
        %v1522 = vmul.f32 %v1512, %v1521
        %v1523 = vmul.f32 %v1513, %v1521
        %v1524 = vmul.f32 %v1514, %v1521
        %v1525 = vmul.f32 %v1515, %v1521
        %v1526 = vmul.f32 %v1516, %v1521
        %v1527 = vmul.f32 %v1517, %v1521
        %v1528 = vmul.f32 %v1518, %v1521
        %v1529 = vmul.f32 %v1519, %v1521
        %v1530 = vmax.f32 %v1522, 0.0
        %v1531 = vmax.f32 %v1523, 0.0
        %v1532 = vmax.f32 %v1524, 0.0
        %v1533 = vmax.f32 %v1525, 0.0
        %v1534 = vmax.f32 %v1526, 0.0
        %v1535 = vmax.f32 %v1527, 0.0
        %v1536 = vmax.f32 %v1528, 0.0
        %v1537 = vmax.f32 %v1529, 0.0
        %v1538 = vpack.c.bf16 %v355, %v354
        %v1539 = vpack.c.bf16 %v357, %v356
        %v1540 = vpack.c.bf16 %v359, %v358
        %v1541 = vpack.c.bf16 %v361, %v360
        %v1542 = vld [vmem:[#allocation10] sm:$0x3]
        %v1543 = vld [vmem:[#allocation12] sm:$0x1]
        %v1545 = vlaneseq
        %v1546 = vshrl.u32 %v1545, 7
        %v1547 = vsub.s32 0, %v1546
        %v1548 = vrot.slane %v1543, %v1547
        %v1551 = vsel %vm408, %v1538, 0
        %v1554 = vsel %vm408, %v1539, 0
        %v1557 = vsel %vm408, %v1540, 0
        %v1560 = vsel %vm408, %v1541, 0
        %v1563 = vsel %vm800, %v1542, 0
        %1565 = vmatprep.subr.bf16.mxu0 0
        %1566 = vmatpush1.bf16.msra.mxu0 %v1563
        %1567 = vmatprep.subr.bf16.mxu0 0
        %1568 = vmatpush1.bf16.msra.mxu0 0
        %1569 = vmatprep.subr.bf16.mxu0 0
        %1570 = vmatpush1.bf16.msra.mxu0 0
        %1571 = vmatprep.subr.bf16.mxu0 0
        %1572 = vmatpush1.bf16.msra.mxu0 0
        %1573 = vmatprep.subr.bf16.mxu0 0
        %1574 = vmatpush1.bf16.msra.mxu0 0
        %1575 = vmatprep.subr.bf16.mxu0 0
        %1576 = vmatpush1.bf16.msra.mxu0 0
        %1577 = vmatprep.subr.bf16.mxu0 0
        %1578 = vmatpush1.bf16.msra.mxu0 0
        %1579 = vmatprep.subr.bf16.mxu0 0
        %1580 = vmatpush1.bf16.msra.mxu0 0
        %1581 = vmatprep.subr.bf16.mxu0 0
        %1582 = vmatpush1.bf16.msra.mxu0 0
        %1583 = vmatprep.subr.bf16.mxu0 0
        %1584 = vmatpush1.bf16.msra.mxu0 0
        %1585 = vmatprep.subr.bf16.mxu0 0
        %1586 = vmatpush1.bf16.msra.mxu0 0
        %1587 = vmatprep.subr.bf16.mxu0 0
        %1588 = vmatpush1.bf16.msra.mxu0 0
        %1589 = vmatprep.subr.bf16.mxu0 0
        %1590 = vmatpush1.bf16.msra.mxu0 0
        %1591 = vmatprep.subr.bf16.mxu0 0
        %1592 = vmatpush1.bf16.msra.mxu0 0
        %1593 = vmatprep.subr.bf16.mxu0 0
        %1594 = vmatpush1.bf16.msra.mxu0 0
        %1595 = vmatprep.subr.bf16.mxu0 0
        %1596 = vmatpush1.bf16.msra.mxu0 0
        %1597 = vmatprep.mubr.bf16.mxu0 0
        %1598 = vmatmul.mubr.bf16.gmra.mrb[0].mxu0 %v1551
        %v1599 = vpop.f32.mrb[0].mxu0
        %v1600 = vadd.f32 %v1548, %v1599
        %v1601 = vpop.f32.mrb[0].mxu0
        %v1602 = vpop.f32.mrb[0].mxu0
        %v1603 = vadd.f32 %v1548, %v1602
        %v1604 = vpop.f32.mrb[0].mxu0
        %1605 = vmatprep.mubr.bf16.mxu0 0
        %1606 = vmatmul.mubr.bf16.gmra.mrb[0].mxu0 %v1554
        %v1607 = vpop.f32.mrb[0].mxu0
        %v1608 = vadd.f32 %v1548, %v1607
        %v1609 = vpop.f32.mrb[0].mxu0
        %v1610 = vpop.f32.mrb[0].mxu0
        %v1611 = vadd.f32 %v1548, %v1610
        %v1612 = vpop.f32.mrb[0].mxu0
        %1613 = vmatprep.mubr.bf16.mxu0 0
        %1614 = vmatmul.mubr.bf16.gmra.mrb[0].mxu0 %v1557
        %v1615 = vpop.f32.mrb[0].mxu0
        %v1616 = vadd.f32 %v1548, %v1615
        %v1617 = vpop.f32.mrb[0].mxu0
        %v1618 = vpop.f32.mrb[0].mxu0
        %v1619 = vadd.f32 %v1548, %v1618
        %v1620 = vpop.f32.mrb[0].mxu0
        %1621 = vmatprep.mubr.bf16.mxu0 0
        %1622 = vmatmul.mubr.bf16.gmra.mrb[0].mxu0 %v1560
        %v1623 = vpop.f32.mrb[0].mxu0
        %v1624 = vadd.f32 %v1548, %v1623
        %v1625 = vpop.f32.mrb[0].mxu0
        %v1626 = vpop.f32.mrb[0].mxu0
        %v1627 = vadd.f32 %v1548, %v1626
        %v1628 = vpop.f32.mrb[0].mxu0
        %1629 = vdwg.mxu0
        %v1630 = vadd.f32 %v1530, %v1600
        %v1631 = vadd.f32 %v1531, %v1603
        %v1632 = vadd.f32 %v1532, %v1608
        %v1633 = vadd.f32 %v1533, %v1611
        %v1634 = vadd.f32 %v1534, %v1616
        %v1635 = vadd.f32 %v1535, %v1619
        %v1636 = vadd.f32 %v1536, %v1624
        %v1637 = vadd.f32 %v1537, %v1627
        %v1638 = vmax.f32 %v1630, 0.0
        %v1639 = vmax.f32 %v1631, 0.0
        %v1640 = vmax.f32 %v1632, 0.0
        %v1641 = vmax.f32 %v1633, 0.0
        %v1642 = vmax.f32 %v1634, 0.0
        %v1643 = vmax.f32 %v1635, 0.0
        %v1644 = vmax.f32 %v1636, 0.0
        %v1645 = vmax.f32 %v1637, 0.0
        %1646 = vst.msk [vmem:[%s296] sm:$0xff] %vm869, %v1638
        %1647 = vst.msk [vmem:[%s296 + $0x8] sm:$0xff] %vm869, %v1639
        %1648 = vst.msk [vmem:[%s296 + $0x10] sm:$0xff] %vm869, %v1640
        %1649 = vst.msk [vmem:[%s296 + $0x18] sm:$0xff] %vm869, %v1641
        %1650 = vst.msk [vmem:[%s296 + $0x20] sm:$0xff] %vm869, %v1642
        %1651 = vst.msk [vmem:[%s296 + $0x28] sm:$0xff] %vm869, %v1643
        %1652 = vst.msk [vmem:[%s296 + $0x30] sm:$0xff] %vm869, %v1644
        %1653 = vst.msk [vmem:[%s296 + $0x38] sm:$0xff] %vm869, %v1645
        %s1654 = sand.u32 %s142, 1
        %s1655 = scalar_lea.sflag [#allocation6], %s1654
        %s1656 = sand.u32 %s142, 1
        %s1657 = smul.addr %s1656, 64
        %s1658 = scalar_lea.vmem [#allocation13], %s1657
        // Predicated region
        $region61: #{tpu_custom_call.1} parent=39 // pred_check
          %p1659 = pneg %p152
        $region62: #{tpu_custom_call.1} parent=39 // pred_check_branch
          %1661 = sbr.rel (%p1659) target = $region64
        $region63: #{tpu_custom_call.1} parent=39 // pred_region
          %s1663 = ssub.s32 1024, 1024
          %1664 = vsyncadd %s1655, %s1663
          %s1665 = smul.addr %s24, 8
          %s1666 = smul.addr %s1665, 128
          %s1667 = scalar_lea.hbm %s5, %s1666
          %s1668 = sshll.u32 %s1658, 4
          %s1669 = int_to_ptr.vmem [resolvable:$true] %s1668
          %1674 = dma.vmem_to_hbm [thread:$0]  %s1669, 1024, %s1667, %s1655, 128, 128, 8
        $region64: #{tpu_custom_call.1} parent=39 // pred_fallthru
          _
      $region40: #{tpu_custom_call.1} parent=5 // pred_fallthru
        _
      %p1675 = scmp.le.s32.totalorder 2, %s19
      // Predicated region
      $region65: #{tpu_custom_call.1} parent=5 // pred_check
        %p1676 = pneg %p1675
      $region66: #{tpu_custom_call.1} parent=5 // pred_check_branch
        %1678 = sbr.rel (%p1676) target = $region68
      $region67: #{tpu_custom_call.1} parent=5 // pred_region
        %s1679 = ssub.s32 %s19, 2
        // Predicated region
        $region69: #{tpu_custom_call.1} parent=67 // pred_check
          %p1680 = pneg %p158
        $region70: #{tpu_custom_call.1} parent=67 // pred_check_branch
          %1682 = sbr.rel (%p1680) target = $region72
        $region71: #{tpu_custom_call.1} parent=67 // pred_region
          %s1683 = sand.u32 %s143, 1
          %s1684 = scalar_lea.sflag [#allocation6], %s1683
          %s1685 = sand.u32 %s143, 1
          %s1686 = smul.addr %s1685, 64
          %s1687 = scalar_lea.vmem [#allocation13], %s1686
          %1688 = dma.done %s1684, 1024
        $region72: #{tpu_custom_call.1} parent=67 // pred_fallthru
          _
      $region68: #{tpu_custom_call.1} parent=5 // pred_fallthru
        _
    $region6: #{tpu_custom_call.1} parent=1 // loop_footer
      %s23 = sadd.s32 1, %s19
    $region7: #{tpu_custom_call.1} parent=1 // loop_footer_branch
      %18 = sbr.rel target = $region3
    $region8: #{tpu_custom_call.1} parent=1 // loop_exit
      _
    %1689 = vsyncpa [#allocation5], 1
    %s1690 = scalar_lea.sflag [#allocation5], 1
    %1691 = vsyncpa %s1690, 1
    %1692 = vsyncpa [#allocation8], 1
    %1693 = vsyncpa [#allocation11], 1
    %1694 = vsyncpa [#allocation6], 1
    %s1695 = scalar_lea.sflag [#allocation6], 1
    %1696 = vsyncpa %s1695, 1

</llo_original>
